<compile_context>
chip_gen: v7x
topology: tpu7x:2x2x1
jax: 0.10.0
libtpu: 0.0.40
codegen_flags: <defaults>
</compile_context>

<pallas_src>
import math

import jax
import jax.numpy as jnp
from jax.experimental import pallas as pl
from jax.experimental.pallas import tpu as pltpu

_BN_EPS = 1e-5


def _fold_bn(gamma, beta, mean, var, eps=_BN_EPS):
    """Fold inference-mode BatchNorm into per-channel scale/bias rows."""
    scale = gamma / jnp.sqrt(var + eps)
    bias = beta - mean * scale
    return scale.reshape(1, -1), bias.reshape(1, -1)


def _inverted_residual_pallas(x_nhwc, w1, b1, wd9, b2, w3, b3, use_res,
                              num_blocks=None):
    """Fused expand -> depthwise(3x3, s=1, p=1) -> project.  x: (B,H,W,Cin).

    w1 (Cin,hid) and w3 (hid,Cout) arrive bf16 with BN scales pre-folded;
    wd9 (9,hid) is f32 with BN scale pre-folded; b1/b2/b3 are folded biases.
    """
    B, H, W, Cin = x_nhwc.shape
    hid = w1.shape[1]
    Cout = w3.shape[1]
    # W % 8 keeps the (bb*H*W, C) <-> (bb, H, W, C) in-kernel reshapes
    # tile-exact (pure metadata, no data movement).
    assert W % 8 == 0, "W must be a multiple of 8 for the free in-kernel reshape"

    if num_blocks is None:
        # >=2 parallel steps when possible (both v7x TCs busy); remaining batch
        # is folded into the matmul M dim (deeper MXU M, fewer grid steps on
        # single-TC v5e/v6e).
        num_blocks = 2 if (B % 2 == 0 and B >= 2) else 1
    assert B % num_blocks == 0
    bb = B // num_blocks
    M = bb * H * W

    def kernel(x_ref, w1_ref, b1_ref, wd_ref, b2_ref, w3_ref, b3_ref, o_ref):
        x2d = x_ref[...].reshape(M, Cin)                          # f32

        # ---- stage 1: 1x1 expand (MXU bf16 x bf16 -> f32) + bias + ReLU6 ----
        h = jnp.dot(x2d.astype(jnp.bfloat16), w1_ref[...],
                    preferred_element_type=jnp.float32)           # (M, hid)
        h = jnp.clip(h + b1_ref[...], 0.0, 6.0)
        h4 = h.reshape(bb, H, W, hid)

        # ---- stage 2: 3x3 depthwise conv, stride 1, pad 1 (VPU + XLU, f32) --
        # In-register shifts; no padded VMEM scratch, no store/reload.
        zcol = jnp.zeros((bb, H, 1, hid), jnp.float32)
        h_xm1 = jnp.concatenate([zcol, h4[:, :, :W - 1, :]], axis=2)  # x-1
        h_xp1 = jnp.concatenate([h4[:, :, 1:, :], zcol], axis=2)      # x+1
        zrow = jnp.zeros((bb, 1, W, hid), jnp.float32)

        def pad_h(a):                                     # (bb, H+2, W, hid)
            return jnp.concatenate([zrow, a, zrow], axis=1)

        cols = (pad_h(h_xm1), pad_h(h4), pad_h(h_xp1))            # kx = 0,1,2
        wd = wd_ref[...]                                          # (9, hid)
        acc = None
        for ky in range(3):                                       # unrolled
            for kx in range(3):
                t = 3 * ky + kx
                tap = cols[kx][:, ky:ky + H] * wd[t:t + 1, :]     # bcast lanes
                acc = tap if acc is None else acc + tap
        acc = jnp.clip(acc + b2_ref[...], 0.0, 6.0)               # (bb,H,W,hid)

        # ---- stage 3: 1x1 project (MXU bf16 -> f32) + bias (+ residual) -----
        y = jnp.dot(acc.reshape(M, hid).astype(jnp.bfloat16), w3_ref[...],
                    preferred_element_type=jnp.float32)           # (M, Cout)
        y = y + b3_ref[...]
        if use_res:
            y = y + x2d
        # TODO(synk): Cout=32 keeps this epilogue/store at 32/128 lane
        # occupancy (masked vst); a space-to-channel packed output layout
        # (4 W positions x 32 channels = 128 lanes) is the clean long-term fix.
        o_ref[...] = y.reshape(bb, H, W, Cout).astype(o_ref.dtype)

    flops = 2 * B * H * W * (Cin * hid + 9 * hid + hid * Cout)
    # Weights / biases are revisited across grid steps, not re-fetched: count once.
    bytes_accessed = (x_nhwc.size * x_nhwc.dtype.itemsize
                      + B * H * W * Cout * x_nhwc.dtype.itemsize
                      + w1.size * 2 + w3.size * 2 + wd9.size * 4
                      + (b1.size + b2.size + b3.size) * 4)

    return pl.pallas_call(
        kernel,
        out_shape=jax.ShapeDtypeStruct((B, H, W, Cout), x_nhwc.dtype),
        grid=(num_blocks,),
        in_specs=[
            pl.BlockSpec((bb, H, W, Cin), lambda i: (i, 0, 0, 0)),  # x
            pl.BlockSpec((Cin, hid), lambda i: (0, 0)),             # W1 (bf16)
            pl.BlockSpec((1, hid), lambda i: (0, 0)),               # bias1
            pl.BlockSpec((9, hid), lambda i: (0, 0)),               # Wd  (f32)
            pl.BlockSpec((1, hid), lambda i: (0, 0)),               # bias2
            pl.BlockSpec((hid, Cout), lambda i: (0, 0)),            # W3 (bf16)
            pl.BlockSpec((1, Cout), lambda i: (0, 0)),              # bias3
        ],
        out_specs=pl.BlockSpec((bb, H, W, Cout), lambda i: (i, 0, 0, 0)),
        compiler_params=pltpu.CompilerParams(
            dimension_semantics=("parallel",)),
        cost_estimate=pl.CostEstimate(flops=flops, transcendentals=0,
                                      bytes_accessed=int(bytes_accessed)),
    )(x_nhwc, w1, b1, wd9, b2, w3, b3)


class InvertedResidualPallas:
    """Inference-mode InvertedResidual; BN folded once, NCHW in/out like PyTorch."""

    def __init__(self, inp, oup, stride=1, expand_ratio=4, residual=True, *,
                 key, dtype=jnp.float32):
        assert stride in (1, 2)
        hidden_dim = int(round(inp * expand_ratio))
        # TODO(synk): stride == 2 (downsampling depthwise) and expand_ratio == 1
        # (no expand conv) variants are not implemented in the fused kernel.
        if stride != 1 or expand_ratio == 1:
            raise NotImplementedError(
                "fused kernel supports stride=1 and expand_ratio != 1")

        self.stride = stride
        self.inp, self.oup, self.hidden_dim = inp, oup, hidden_dim
        self.use_res_connect = (stride == 1 and inp == oup) and residual

        keys = jax.random.split(key, 15)
        # Raw params (channels-last / (in, out) layouts), used by reference().
        self.w1 = (jax.random.normal(keys[0], (inp, hidden_dim), dtype)
                   / math.sqrt(inp))
        self.wd = jax.random.normal(keys[1], (3, 3, hidden_dim), dtype) / 3.0
        self.w3 = (jax.random.normal(keys[2], (hidden_dim, oup), dtype)
                   / math.sqrt(hidden_dim))

        def bn_init(k0, k1, k2, k3, c):
            gamma = 1.0 + 0.1 * jax.random.normal(k0, (c,), dtype)
            beta = 0.1 * jax.random.normal(k1, (c,), dtype)
            mean = 0.1 * jax.random.normal(k2, (c,), dtype)
            var = 0.5 + jax.random.uniform(k3, (c,), dtype)
            return gamma, beta, mean, var

        self.bn1 = bn_init(*keys[3:7], hidden_dim)
        self.bn2 = bn_init(*keys[7:11], hidden_dim)
        self.bn3 = bn_init(*keys[11:15], oup)

        # Fold BN scales into the conv weights ONCE (inference constants);
        # only the biases remain as kernel inputs.  MXU weights go to bf16.
        s1, self.b1 = _fold_bn(*self.bn1)
        s2, self.b2 = _fold_bn(*self.bn2)
        s3, self.b3 = _fold_bn(*self.bn3)
        self.w1_f = (self.w1 * s1).astype(jnp.bfloat16)                 # (Cin, hid)
        self.wd_f = (self.wd.reshape(9, hidden_dim) * s2).astype(jnp.float32)
        self.w3_f = (self.w3 * s3).astype(jnp.bfloat16)                 # (hid, Cout)

    def __call__(self, x_nchw):
        # TODO(synk): in a full network keep activations NHWC end-to-end; these
        # transposes only exist to match the PyTorch NCHW interface (jit the
        # caller so they fuse with neighbouring ops).
        x = jnp.transpose(x_nchw, (0, 2, 3, 1))                  # NHWC
        y = _inverted_residual_pallas(
            x, self.w1_f, self.b1, self.wd_f, self.b2, self.w3_f, self.b3,
            self.use_res_connect)
        return jnp.transpose(y, (0, 3, 1, 2))                    # back to NCHW

    def reference(self, x_nchw):
        """Pure-JAX (XLA conv, HIGHEST precision) eval-mode forward."""
        x = jnp.transpose(x_nchw, (0, 2, 3, 1))
        hid, cin, cout = self.hidden_dim, self.inp, self.oup
        dn = ("NHWC", "HWIO", "NHWC")
        hp = jax.lax.Precision.HIGHEST

        def bn(y, p):
            g, b, m, v = p
            return (y - m) * (g / jnp.sqrt(v + _BN_EPS)) + b

        h = jax.lax.conv_general_dilated(
            x, self.w1.reshape(1, 1, cin, hid), (1, 1), "VALID",
            dimension_numbers=dn, precision=hp)
        h = jnp.clip(bn(h, self.bn1), 0.0, 6.0)
        h = jax.lax.conv_general_dilated(
            h, self.wd.reshape(3, 3, 1, hid), (self.stride, self.stride),
            ((1, 1), (1, 1)), dimension_numbers=dn,
            feature_group_count=hid, precision=hp)
        h = jnp.clip(bn(h, self.bn2), 0.0, 6.0)
        y = jax.lax.conv_general_dilated(
            h, self.w3.reshape(1, 1, hid, cout), (1, 1), "VALID",
            dimension_numbers=dn, precision=hp)
        y = bn(y, self.bn3)
        if self.use_res_connect:
            y = y + x
        return jnp.transpose(y, (0, 3, 1, 2))


if __name__ == "__main__":
    key = jax.random.PRNGKey(0)
    k_params, k_x = jax.random.split(key)

    # inp=oup=32, expand_ratio=4 -> hidden_dim=128 (lane-dense), stride=1,
    # residual connection active.
    B, C, H, W = 2, 32, 16, 16
    block = InvertedResidualPallas(inp=C, oup=C, stride=1, expand_ratio=4,
                                   residual=True, key=k_params)

    x = jax.random.normal(k_x, (B, C, H, W), dtype=jnp.float32)

    fwd = jax.jit(block.__call__)        # fuse NCHW<->NHWC layout ops
    y = jax.block_until_ready(fwd(x))

    y_ref = block.reference(x)
    assert y.shape == (B, C, H, W)
    # bf16 MXU operands (f32 accumulation) vs. the HIGHEST-precision f32
    # reference: check worst-element error relative to the output scale.
    err = float(jnp.max(jnp.abs(y - y_ref)))
    scale = float(jnp.max(jnp.abs(y_ref))) + 1e-6
    assert err / scale < 3e-2, f"relative error too large: {err / scale} (abs {err})"

    print("KERNEL_OK")
</pallas_src>

<mosaic_0001>
module attributes {stable_mosaic.version = 11 : i64} {
  func.func @kernel(%arg0: i32, %arg1: memref<1x16x16x32xf32, #tpu.memory_space<vmem>>, %arg2: memref<32x128xbf16, #tpu.memory_space<vmem>>, %arg3: memref<1x128xf32, #tpu.memory_space<vmem>>, %arg4: memref<9x128xf32, #tpu.memory_space<vmem>>, %arg5: memref<1x128xf32, #tpu.memory_space<vmem>>, %arg6: memref<128x32xbf16, #tpu.memory_space<vmem>>, %arg7: memref<1x32xf32, #tpu.memory_space<vmem>>, %arg8: memref<1x16x16x32xf32, #tpu.memory_space<vmem>>) attributes {dimension_semantics = [#tpu.dimension_semantics<parallel>], iteration_bounds = array<i64: 2>, scalar_prefetch = 0 : i64, scratch_operands = 0 : i64, tpu.core_type = #tpu.core_type<tc>, window_params = [{transform_indices = @transform_0, window_bounds = array<i64: 1, 16, 16, 32>}, {pipeline_mode = #tpu.pipeline_mode<synchronous>, transform_indices = @transform_1, window_bounds = array<i64: 32, 128>}, {pipeline_mode = #tpu.pipeline_mode<synchronous>, transform_indices = @transform_2, window_bounds = array<i64: 1, 128>}, {pipeline_mode = #tpu.pipeline_mode<synchronous>, transform_indices = @transform_3, window_bounds = array<i64: 9, 128>}, {pipeline_mode = #tpu.pipeline_mode<synchronous>, transform_indices = @transform_4, window_bounds = array<i64: 1, 128>}, {pipeline_mode = #tpu.pipeline_mode<synchronous>, transform_indices = @transform_5, window_bounds = array<i64: 128, 32>}, {pipeline_mode = #tpu.pipeline_mode<synchronous>, transform_indices = @transform_6, window_bounds = array<i64: 1, 32>}, {transform_indices = @transform_7, window_bounds = array<i64: 1, 16, 16, 32>}]} {
    %c0 = arith.constant 0 : index
    %c0_0 = arith.constant 0 : index
    %c0_1 = arith.constant 0 : index
    %c0_2 = arith.constant 0 : index
    %0 = vector.load %arg1[%c0, %c0_0, %c0_1, %c0_2] : memref<1x16x16x32xf32, #tpu.memory_space<vmem>>, vector<1x16x16x32xf32>
    %1 = vector.shape_cast %0 : vector<1x16x16x32xf32> to vector<256x32xf32>
    %2 = arith.truncf %1 : vector<256x32xf32> to vector<256x32xbf16>
    %c0_3 = arith.constant 0 : index
    %c0_4 = arith.constant 0 : index
    %3 = vector.load %arg2[%c0_3, %c0_4] : memref<32x128xbf16, #tpu.memory_space<vmem>>, vector<32x128xbf16>
    %cst = arith.constant dense<0.000000e+00> : vector<256x128xf32>
    %4 = tpu.matmul %2, %3, %cst {dimension_numbers = #tpu.dot_dimension_numbers<[1], [0], [0], [1], [0, 0, 1, 1], [], []>} : vector<256x32xbf16>, vector<32x128xbf16>, vector<256x128xf32> -> vector<256x128xf32>
    %c0_5 = arith.constant 0 : index
    %c0_6 = arith.constant 0 : index
    %5 = vector.load %arg3[%c0_5, %c0_6] : memref<1x128xf32, #tpu.memory_space<vmem>>, vector<1x128xf32>
    %6 = vector.broadcast %5 : vector<1x128xf32> to vector<256x128xf32>
    %7 = arith.addf %4, %6 : vector<256x128xf32>
    %cst_7 = arith.constant 0.000000e+00 : f32
    %cst_8 = arith.constant 6.000000e+00 : f32
    %8 = vector.broadcast %cst_7 : f32 to vector<256x128xf32>
    %9 = arith.maximumf %8, %7 : vector<256x128xf32>
    %10 = vector.broadcast %cst_8 : f32 to vector<256x128xf32>
    %11 = arith.minimumf %10, %9 : vector<256x128xf32>
    %12 = vector.shape_cast %11 : vector<256x128xf32> to vector<1x16x16x128xf32>
    %cst_9 = arith.constant 0.000000e+00 : f32
    %13 = vector.broadcast %cst_9 : f32 to vector<1x16x1x128xf32>
    %14 = vector.extract_strided_slice %12 {offsets = [0, 0, 0, 0], sizes = [1, 16, 15, 128], strides = [1, 1, 1, 1]} : vector<1x16x16x128xf32> to vector<1x16x15x128xf32>
    %15 = tpu.concatenate %13, %14 in 2 : vector<1x16x1x128xf32>, vector<1x16x15x128xf32> -> vector<1x16x16x128xf32>
    %16 = vector.extract_strided_slice %12 {offsets = [0, 0, 1, 0], sizes = [1, 16, 15, 128], strides = [1, 1, 1, 1]} : vector<1x16x16x128xf32> to vector<1x16x15x128xf32>
    %17 = tpu.concatenate %16, %13 in 2 : vector<1x16x15x128xf32>, vector<1x16x1x128xf32> -> vector<1x16x16x128xf32>
    %cst_10 = arith.constant 0.000000e+00 : f32
    %18 = vector.broadcast %cst_10 : f32 to vector<1x1x16x128xf32>
    %19 = tpu.concatenate %18, %15, %18 in 1 : vector<1x1x16x128xf32>, vector<1x16x16x128xf32>, vector<1x1x16x128xf32> -> vector<1x18x16x128xf32>
    %20 = tpu.concatenate %18, %12, %18 in 1 : vector<1x1x16x128xf32>, vector<1x16x16x128xf32>, vector<1x1x16x128xf32> -> vector<1x18x16x128xf32>
    %21 = tpu.concatenate %18, %17, %18 in 1 : vector<1x1x16x128xf32>, vector<1x16x16x128xf32>, vector<1x1x16x128xf32> -> vector<1x18x16x128xf32>
    %c0_11 = arith.constant 0 : index
    %c0_12 = arith.constant 0 : index
    %22 = vector.load %arg4[%c0_11, %c0_12] : memref<9x128xf32, #tpu.memory_space<vmem>>, vector<9x128xf32>
    %23 = vector.extract_strided_slice %19 {offsets = [0, 0, 0, 0], sizes = [1, 16, 16, 128], strides = [1, 1, 1, 1]} : vector<1x18x16x128xf32> to vector<1x16x16x128xf32>
    %24 = vector.extract_strided_slice %22 {offsets = [0, 0], sizes = [1, 128], strides = [1, 1]} : vector<9x128xf32> to vector<1x128xf32>
    %25 = vector.shape_cast %24 : vector<1x128xf32> to vector<1x1x1x128xf32>
    %26 = vector.broadcast %25 : vector<1x1x1x128xf32> to vector<1x16x16x128xf32>
    %27 = arith.mulf %23, %26 : vector<1x16x16x128xf32>
    %28 = vector.extract_strided_slice %20 {offsets = [0, 0, 0, 0], sizes = [1, 16, 16, 128], strides = [1, 1, 1, 1]} : vector<1x18x16x128xf32> to vector<1x16x16x128xf32>
    %29 = vector.extract_strided_slice %22 {offsets = [1, 0], sizes = [1, 128], strides = [1, 1]} : vector<9x128xf32> to vector<1x128xf32>
    %30 = vector.shape_cast %29 : vector<1x128xf32> to vector<1x1x1x128xf32>
    %31 = vector.broadcast %30 : vector<1x1x1x128xf32> to vector<1x16x16x128xf32>
    %32 = arith.mulf %28, %31 : vector<1x16x16x128xf32>
    %33 = arith.addf %27, %32 : vector<1x16x16x128xf32>
    %34 = vector.extract_strided_slice %21 {offsets = [0, 0, 0, 0], sizes = [1, 16, 16, 128], strides = [1, 1, 1, 1]} : vector<1x18x16x128xf32> to vector<1x16x16x128xf32>
    %35 = vector.extract_strided_slice %22 {offsets = [2, 0], sizes = [1, 128], strides = [1, 1]} : vector<9x128xf32> to vector<1x128xf32>
    %36 = vector.shape_cast %35 : vector<1x128xf32> to vector<1x1x1x128xf32>
    %37 = vector.broadcast %36 : vector<1x1x1x128xf32> to vector<1x16x16x128xf32>
    %38 = arith.mulf %34, %37 : vector<1x16x16x128xf32>
    %39 = arith.addf %33, %38 : vector<1x16x16x128xf32>
    %40 = vector.extract_strided_slice %19 {offsets = [0, 1, 0, 0], sizes = [1, 16, 16, 128], strides = [1, 1, 1, 1]} : vector<1x18x16x128xf32> to vector<1x16x16x128xf32>
    %41 = vector.extract_strided_slice %22 {offsets = [3, 0], sizes = [1, 128], strides = [1, 1]} : vector<9x128xf32> to vector<1x128xf32>
    %42 = vector.shape_cast %41 : vector<1x128xf32> to vector<1x1x1x128xf32>
    %43 = vector.broadcast %42 : vector<1x1x1x128xf32> to vector<1x16x16x128xf32>
    %44 = arith.mulf %40, %43 : vector<1x16x16x128xf32>
    %45 = arith.addf %39, %44 : vector<1x16x16x128xf32>
    %46 = vector.extract_strided_slice %20 {offsets = [0, 1, 0, 0], sizes = [1, 16, 16, 128], strides = [1, 1, 1, 1]} : vector<1x18x16x128xf32> to vector<1x16x16x128xf32>
    %47 = vector.extract_strided_slice %22 {offsets = [4, 0], sizes = [1, 128], strides = [1, 1]} : vector<9x128xf32> to vector<1x128xf32>
    %48 = vector.shape_cast %47 : vector<1x128xf32> to vector<1x1x1x128xf32>
    %49 = vector.broadcast %48 : vector<1x1x1x128xf32> to vector<1x16x16x128xf32>
    %50 = arith.mulf %46, %49 : vector<1x16x16x128xf32>
    %51 = arith.addf %45, %50 : vector<1x16x16x128xf32>
    %52 = vector.extract_strided_slice %21 {offsets = [0, 1, 0, 0], sizes = [1, 16, 16, 128], strides = [1, 1, 1, 1]} : vector<1x18x16x128xf32> to vector<1x16x16x128xf32>
    %53 = vector.extract_strided_slice %22 {offsets = [5, 0], sizes = [1, 128], strides = [1, 1]} : vector<9x128xf32> to vector<1x128xf32>
    %54 = vector.shape_cast %53 : vector<1x128xf32> to vector<1x1x1x128xf32>
    %55 = vector.broadcast %54 : vector<1x1x1x128xf32> to vector<1x16x16x128xf32>
    %56 = arith.mulf %52, %55 : vector<1x16x16x128xf32>
    %57 = arith.addf %51, %56 : vector<1x16x16x128xf32>
    %58 = vector.extract_strided_slice %19 {offsets = [0, 2, 0, 0], sizes = [1, 16, 16, 128], strides = [1, 1, 1, 1]} : vector<1x18x16x128xf32> to vector<1x16x16x128xf32>
    %59 = vector.extract_strided_slice %22 {offsets = [6, 0], sizes = [1, 128], strides = [1, 1]} : vector<9x128xf32> to vector<1x128xf32>
    %60 = vector.shape_cast %59 : vector<1x128xf32> to vector<1x1x1x128xf32>
    %61 = vector.broadcast %60 : vector<1x1x1x128xf32> to vector<1x16x16x128xf32>
    %62 = arith.mulf %58, %61 : vector<1x16x16x128xf32>
    %63 = arith.addf %57, %62 : vector<1x16x16x128xf32>
    %64 = vector.extract_strided_slice %20 {offsets = [0, 2, 0, 0], sizes = [1, 16, 16, 128], strides = [1, 1, 1, 1]} : vector<1x18x16x128xf32> to vector<1x16x16x128xf32>
    %65 = vector.extract_strided_slice %22 {offsets = [7, 0], sizes = [1, 128], strides = [1, 1]} : vector<9x128xf32> to vector<1x128xf32>
    %66 = vector.shape_cast %65 : vector<1x128xf32> to vector<1x1x1x128xf32>
    %67 = vector.broadcast %66 : vector<1x1x1x128xf32> to vector<1x16x16x128xf32>
    %68 = arith.mulf %64, %67 : vector<1x16x16x128xf32>
    %69 = arith.addf %63, %68 : vector<1x16x16x128xf32>
    %70 = vector.extract_strided_slice %21 {offsets = [0, 2, 0, 0], sizes = [1, 16, 16, 128], strides = [1, 1, 1, 1]} : vector<1x18x16x128xf32> to vector<1x16x16x128xf32>
    %71 = vector.extract_strided_slice %22 {offsets = [8, 0], sizes = [1, 128], strides = [1, 1]} : vector<9x128xf32> to vector<1x128xf32>
    %72 = vector.shape_cast %71 : vector<1x128xf32> to vector<1x1x1x128xf32>
    %73 = vector.broadcast %72 : vector<1x1x1x128xf32> to vector<1x16x16x128xf32>
    %74 = arith.mulf %70, %73 : vector<1x16x16x128xf32>
    %75 = arith.addf %69, %74 : vector<1x16x16x128xf32>
    %c0_13 = arith.constant 0 : index
    %c0_14 = arith.constant 0 : index
    %76 = vector.load %arg5[%c0_13, %c0_14] : memref<1x128xf32, #tpu.memory_space<vmem>>, vector<1x128xf32>
    %77 = vector.shape_cast %76 : vector<1x128xf32> to vector<1x1x1x128xf32>
    %78 = vector.broadcast %77 : vector<1x1x1x128xf32> to vector<1x16x16x128xf32>
    %79 = arith.addf %75, %78 : vector<1x16x16x128xf32>
    %cst_15 = arith.constant 0.000000e+00 : f32
    %cst_16 = arith.constant 6.000000e+00 : f32
    %80 = vector.broadcast %cst_15 : f32 to vector<1x16x16x128xf32>
    %81 = arith.maximumf %80, %79 : vector<1x16x16x128xf32>
    %82 = vector.broadcast %cst_16 : f32 to vector<1x16x16x128xf32>
    %83 = arith.minimumf %82, %81 : vector<1x16x16x128xf32>
    %84 = vector.shape_cast %83 : vector<1x16x16x128xf32> to vector<256x128xf32>
    %85 = arith.truncf %84 : vector<256x128xf32> to vector<256x128xbf16>
    %c0_17 = arith.constant 0 : index
    %c0_18 = arith.constant 0 : index
    %86 = vector.load %arg6[%c0_17, %c0_18] : memref<128x32xbf16, #tpu.memory_space<vmem>>, vector<128x32xbf16>
    %cst_19 = arith.constant dense<0.000000e+00> : vector<256x32xf32>
    %87 = tpu.matmul %85, %86, %cst_19 {dimension_numbers = #tpu.dot_dimension_numbers<[1], [0], [0], [1], [0, 0, 1, 1], [], []>} : vector<256x128xbf16>, vector<128x32xbf16>, vector<256x32xf32> -> vector<256x32xf32>
    %c0_20 = arith.constant 0 : index
    %c0_21 = arith.constant 0 : index
    %88 = vector.load %arg7[%c0_20, %c0_21] : memref<1x32xf32, #tpu.memory_space<vmem>>, vector<1x32xf32>
    %89 = vector.broadcast %88 : vector<1x32xf32> to vector<256x32xf32>
    %90 = arith.addf %87, %89 : vector<256x32xf32>
    %91 = arith.addf %90, %1 : vector<256x32xf32>
    %92 = vector.shape_cast %91 : vector<256x32xf32> to vector<1x16x16x32xf32>
    %c0_22 = arith.constant 0 : index
    %c0_23 = arith.constant 0 : index
    %c0_24 = arith.constant 0 : index
    %c0_25 = arith.constant 0 : index
    %93 = vector.load %arg8[%c0_22, %c0_23, %c0_24, %c0_25] : memref<1x16x16x32xf32, #tpu.memory_space<vmem>>, vector<1x16x16x32xf32>
    tpu.vector_store %arg8[%c0_22, %c0_23, %c0_24, %c0_25], %92 {strides = array<i32>} : memref<1x16x16x32xf32, #tpu.memory_space<vmem>>, vector<1x16x16x32xf32>,
    return
  }
  func.func @transform_0(%arg0: i32) -> (i32, i32, i32, i32) {
    %c0_i32 = arith.constant 0 : i32
    %c0_i32_0 = arith.constant 0 : i32
    %c0_i32_1 = arith.constant 0 : i32
    %c0_i32_2 = arith.constant 0 : i32
    return %arg0, %c0_i32, %c0_i32_0, %c0_i32_1 : i32, i32, i32, i32
  }
  func.func @transform_1(%arg0: i32) -> (i32, i32) {
    %c0_i32 = arith.constant 0 : i32
    %c0_i32_0 = arith.constant 0 : i32
    %c0_i32_1 = arith.constant 0 : i32
    return %c0_i32, %c0_i32_0 : i32, i32
  }
  func.func @transform_2(%arg0: i32) -> (i32, i32) {
    %c0_i32 = arith.constant 0 : i32
    %c0_i32_0 = arith.constant 0 : i32
    %c0_i32_1 = arith.constant 0 : i32
    return %c0_i32, %c0_i32_0 : i32, i32
  }
  func.func @transform_3(%arg0: i32) -> (i32, i32) {
    %c0_i32 = arith.constant 0 : i32
    %c0_i32_0 = arith.constant 0 : i32
    %c0_i32_1 = arith.constant 0 : i32
    return %c0_i32, %c0_i32_0 : i32, i32
  }
  func.func @transform_4(%arg0: i32) -> (i32, i32) {
    %c0_i32 = arith.constant 0 : i32
    %c0_i32_0 = arith.constant 0 : i32
    %c0_i32_1 = arith.constant 0 : i32
    return %c0_i32, %c0_i32_0 : i32, i32
  }
  func.func @transform_5(%arg0: i32) -> (i32, i32) {
    %c0_i32 = arith.constant 0 : i32
    %c0_i32_0 = arith.constant 0 : i32
    %c0_i32_1 = arith.constant 0 : i32
    return %c0_i32, %c0_i32_0 : i32, i32
  }
  func.func @transform_6(%arg0: i32) -> (i32, i32) {
    %c0_i32 = arith.constant 0 : i32
    %c0_i32_0 = arith.constant 0 : i32
    %c0_i32_1 = arith.constant 0 : i32
    return %c0_i32, %c0_i32_0 : i32, i32
  }
  func.func @transform_7(%arg0: i32) -> (i32, i32, i32, i32) {
    %c0_i32 = arith.constant 0 : i32
    %c0_i32_0 = arith.constant 0 : i32
    %c0_i32_1 = arith.constant 0 : i32
    %c0_i32_2 = arith.constant 0 : i32
    return %arg0, %c0_i32, %c0_i32_0, %c0_i32_1 : i32, i32, i32, i32
  }
}

</mosaic_0001>

<llo_original>
// kernel: a_call__.1
$region0: #{a_call__.1}
  #allocation0 [shape = 'u32[]', space=smem, size = 0x4, offset = 0x4, fixed_abs, tag = 'smem constant byte address 0x4 - core index']
  #allocation1 [shape = 'u32[144,128]{1,0:T(1,128)}', space=vmem, size = 0x12000, scoped, tag = 'internal scratch']
  %s0 = inlined_call_operand.hbm [shape: f32[2,16,16,32], index: 0, kind: input, shape index: {}]
  %s1 = inlined_call_operand.vmem [shape: bf16[32,128], index: 1, kind: input, shape index: {}]
  %s2 = inlined_call_operand.vmem [shape: f32[1,128], index: 2, kind: input, shape index: {}]
  %s3 = inlined_call_operand.hbm [shape: f32[9,128], index: 3, kind: input, shape index: {}]
  %s4 = inlined_call_operand.vmem [shape: f32[1,128], index: 4, kind: input, shape index: {}]
  %s5 = inlined_call_operand.hbm [shape: bf16[128,32], index: 5, kind: input, shape index: {}]
  %s6 = inlined_call_operand.vmem [shape: f32[1,32], index: 6, kind: input, shape index: {}]
  %s7 = inlined_call_operand.hbm [shape: f32[2,16,16,32], index: 7, kind: output, shape index: {}]
  %s8 = sld [smem:[#allocation0]]
  $region73: #{a_call__.1} parent=0
    _
  %s10 = ssub.s32 1, %s8
  %s11 = scalar_select 0, %s10, %s8
  $region1: #{a_call__.1} parent=0
    #allocation2 [shape = 'u8[262144]{0}', space=vmem, size = 0x40000, scoped, tag = 'input window, operand 0']
    #allocation3 [shape = 's32[2]{0}', space=sflag, size = 0x8, scoped, tag = 'scoped memory for a_call__.1']
    #allocation4 [shape = 's32[2]{0}', space=sflag, size = 0x8, scoped, tag = 'scoped memory for a_call__.1']
    #allocation5 [shape = 'u8[8192]{0}', space=vmem, size = 0x2000, scoped, tag = 'input window, operand 3, single buffered']
    #allocation6 [shape = 's32[1]{0}', space=sflag, size = 0x4, scoped, tag = 'scoped memory for a_call__.1']
    #allocation7 [shape = 'u8[32768]{0}', space=vmem, size = 0x8000, scoped, tag = 'input window, operand 5, single buffered']
    #allocation8 [shape = 'u8[262144]{0}', space=vmem, size = 0x40000, scoped, tag = 'output window, operand 0']
    %12 = vsyncpa [#allocation3], 0
    %s13 = scalar_lea.sflag [#allocation3], 1
    %14 = vsyncpa %s13, 0
    %15 = vsyncpa [#allocation6], 0
    %16 = vsyncpa [#allocation4], 0
    %s17 = scalar_lea.sflag [#allocation4], 1
    %18 = vsyncpa %s17, 0
    loop: start=0, step=1, limit=4
    $region2: #{a_call__.1} parent=1 // loop_pre_header
      _
    $region3: #{a_call__.1} parent=1 // loop_header
      %s20 = sphi 0, %s24
      %p21 = scmp.ge.s32.totalorder %s20, 4
      %s30 = sphi 0, %s32
      %s33 = sphi 0, %s30
      %s34 = sphi 0, %s33
      %s50 = sphi 0, %s34
      %s54 = sphi 0, %s54
      %s56 = sphi 0, %s54
      %s57 = sphi 0, %s56
      %s71 = sphi 0, %s57
      %s75 = sphi 0, %s75
      %s77 = sphi 0, %s75
      %s78 = sphi 0, %s77
      %s92 = sphi 0, %s78
      %s96 = sphi 0, %s96
      %s98 = sphi 0, %s96
      %s99 = sphi 0, %s98
      %s113 = sphi 0, %s99
      %s117 = sphi 0, %s117
      %s119 = sphi 0, %s117
      %s120 = sphi 0, %s119
      %s134 = sphi 0, %s120
      %s138 = sphi 0, %s138
      %s140 = sphi 0, %s138
      %s141 = sphi 0, %s140
      %s155 = sphi 0, %s141
      %s159 = sphi 0, %s159
      %s161 = sphi 0, %s159
      %s162 = sphi 0, %s161
      %s176 = sphi 0, %s162
      %s182 = sphi 0, %s184
      %s185 = sphi 0, %s182
      %s186 = sphi 0, %s185
      %s202 = sphi 0, %s186
    $region4: #{a_call__.1} parent=1 // loop_header_branch
      %23 = sbr.rel (%p21) target = $region8
    $region5: #{a_call__.1} parent=1 // loop_body
      %s25 = ssub.s32 %s20, 1
      %s26 = ssub.s32 %s20, 2
      %s27 = sadd.s32 %s20, 1
      %s28 = ssub.s32 %s20, %s27
      %p29 = scmp.eq.s32.totalorder %s28, 0
      %s31 = sadd.s32 %s30, 1
      %s32 = scalar_select %p29, %s30, %s31
      %p35 = pneg %p29
      %p36 = scmp.eq.s32.totalorder %s20, 1
      %p37 = por %p35, %p36
      %p38 = scmp.ne.s32.totalorder %s30, %s33
      %p39 = scmp.eq.s32.totalorder %s20, 0
      %p40 = por %p38, %p39
      %p41 = scmp.ne.s32.totalorder %s30, %s33
      %p42 = scmp.eq.s32.totalorder %s25, 1
      %p43 = por %p41, %p42
      %p44 = scmp.ne.s32.totalorder %s33, %s34
      %p45 = scmp.eq.s32.totalorder %s25, 0
      %p46 = por %p44, %p45
      %p47 = scmp.ne.s32.totalorder %s33, %s34
      %p48 = scmp.eq.s32.totalorder %s26, 1
      %p49 = por %p47, %p48
      %p51 = scmp.ne.s32.totalorder %s34, %s50
      %p52 = scmp.eq.s32.totalorder %s26, 0
      %p53 = por %p51, %p52
      %s55 = sadd.s32 %s54, 1
      %p58 = scmp.eq.s32.totalorder %s20, 1
      %p59 = scmp.ne.s32.totalorder %s54, %s56
      %p60 = scmp.eq.s32.totalorder %s20, 0
      %p61 = por %p59, %p60
      %p62 = scmp.ne.s32.totalorder %s54, %s56
      %p63 = scmp.eq.s32.totalorder %s25, 1
      %p64 = por %p62, %p63
      %p65 = scmp.ne.s32.totalorder %s56, %s57
      %p66 = scmp.eq.s32.totalorder %s25, 0
      %p67 = por %p65, %p66
      %p68 = scmp.ne.s32.totalorder %s56, %s57
      %p69 = scmp.eq.s32.totalorder %s26, 1
      %p70 = por %p68, %p69
      %p72 = scmp.ne.s32.totalorder %s57, %s71
      %p73 = scmp.eq.s32.totalorder %s26, 0
      %p74 = por %p72, %p73
      %s76 = sadd.s32 %s75, 1
      %p79 = scmp.eq.s32.totalorder %s20, 1
      %p80 = scmp.ne.s32.totalorder %s75, %s77
      %p81 = scmp.eq.s32.totalorder %s20, 0
      %p82 = por %p80, %p81
      %p83 = scmp.ne.s32.totalorder %s75, %s77
      %p84 = scmp.eq.s32.totalorder %s25, 1
      %p85 = por %p83, %p84
      %p86 = scmp.ne.s32.totalorder %s77, %s78
      %p87 = scmp.eq.s32.totalorder %s25, 0
      %p88 = por %p86, %p87
      %p89 = scmp.ne.s32.totalorder %s77, %s78
      %p90 = scmp.eq.s32.totalorder %s26, 1
      %p91 = por %p89, %p90
      %p93 = scmp.ne.s32.totalorder %s78, %s92
      %p94 = scmp.eq.s32.totalorder %s26, 0
      %p95 = por %p93, %p94
      %s97 = sadd.s32 %s96, 1
      %p100 = scmp.eq.s32.totalorder %s20, 1
      %p101 = scmp.ne.s32.totalorder %s96, %s98
      %p102 = scmp.eq.s32.totalorder %s20, 0
      %p103 = por %p101, %p102
      %p104 = scmp.ne.s32.totalorder %s96, %s98
      %p105 = scmp.eq.s32.totalorder %s25, 1
      %p106 = por %p104, %p105
      %p107 = scmp.ne.s32.totalorder %s98, %s99
      %p108 = scmp.eq.s32.totalorder %s25, 0
      %p109 = por %p107, %p108
      %p110 = scmp.ne.s32.totalorder %s98, %s99
      %p111 = scmp.eq.s32.totalorder %s26, 1
      %p112 = por %p110, %p111
      %p114 = scmp.ne.s32.totalorder %s99, %s113
      %p115 = scmp.eq.s32.totalorder %s26, 0
      %p116 = por %p114, %p115
      %s118 = sadd.s32 %s117, 1
      %p121 = scmp.eq.s32.totalorder %s20, 1
      %p122 = scmp.ne.s32.totalorder %s117, %s119
      %p123 = scmp.eq.s32.totalorder %s20, 0
      %p124 = por %p122, %p123
      %p125 = scmp.ne.s32.totalorder %s117, %s119
      %p126 = scmp.eq.s32.totalorder %s25, 1
      %p127 = por %p125, %p126
      %p128 = scmp.ne.s32.totalorder %s119, %s120
      %p129 = scmp.eq.s32.totalorder %s25, 0
      %p130 = por %p128, %p129
      %p131 = scmp.ne.s32.totalorder %s119, %s120
      %p132 = scmp.eq.s32.totalorder %s26, 1
      %p133 = por %p131, %p132
      %p135 = scmp.ne.s32.totalorder %s120, %s134
      %p136 = scmp.eq.s32.totalorder %s26, 0
      %p137 = por %p135, %p136
      %s139 = sadd.s32 %s138, 1
      %p142 = scmp.eq.s32.totalorder %s20, 1
      %p143 = scmp.ne.s32.totalorder %s138, %s140
      %p144 = scmp.eq.s32.totalorder %s20, 0
      %p145 = por %p143, %p144
      %p146 = scmp.ne.s32.totalorder %s138, %s140
      %p147 = scmp.eq.s32.totalorder %s25, 1
      %p148 = por %p146, %p147
      %p149 = scmp.ne.s32.totalorder %s140, %s141
      %p150 = scmp.eq.s32.totalorder %s25, 0
      %p151 = por %p149, %p150
      %p152 = scmp.ne.s32.totalorder %s140, %s141
      %p153 = scmp.eq.s32.totalorder %s26, 1
      %p154 = por %p152, %p153
      %p156 = scmp.ne.s32.totalorder %s141, %s155
      %p157 = scmp.eq.s32.totalorder %s26, 0
      %p158 = por %p156, %p157
      %s160 = sadd.s32 %s159, 1
      %p163 = scmp.eq.s32.totalorder %s20, 1
      %p164 = scmp.ne.s32.totalorder %s159, %s161
      %p165 = scmp.eq.s32.totalorder %s20, 0
      %p166 = por %p164, %p165
      %p167 = scmp.ne.s32.totalorder %s159, %s161
      %p168 = scmp.eq.s32.totalorder %s25, 1
      %p169 = por %p167, %p168
      %p170 = scmp.ne.s32.totalorder %s161, %s162
      %p171 = scmp.eq.s32.totalorder %s25, 0
      %p172 = por %p170, %p171
      %p173 = scmp.ne.s32.totalorder %s161, %s162
      %p174 = scmp.eq.s32.totalorder %s26, 1
      %p175 = por %p173, %p174
      %p177 = scmp.ne.s32.totalorder %s162, %s176
      %p178 = scmp.eq.s32.totalorder %s26, 0
      %p179 = por %p177, %p178
      %s180 = ssub.s32 %s20, %s27
      %p181 = scmp.eq.s32.totalorder %s180, 0
      %s183 = sadd.s32 %s182, 1
      %s184 = scalar_select %p181, %s182, %s183
      %p187 = pneg %p181
      %p188 = scmp.eq.s32.totalorder %s20, 1
      %p189 = por %p187, %p188
      %p190 = scmp.ne.s32.totalorder %s182, %s185
      %p191 = scmp.eq.s32.totalorder %s20, 0
      %p192 = por %p190, %p191
      %p193 = scmp.ne.s32.totalorder %s182, %s185
      %p194 = scmp.eq.s32.totalorder %s25, 1
      %p195 = por %p193, %p194
      %p196 = scmp.ne.s32.totalorder %s185, %s186
      %p197 = scmp.eq.s32.totalorder %s25, 0
      %p198 = por %p196, %p197
      %p199 = scmp.ne.s32.totalorder %s185, %s186
      %p200 = scmp.eq.s32.totalorder %s26, 1
      %p201 = por %p199, %p200
      %p203 = scmp.ne.s32.totalorder %s186, %s202
      %p204 = scmp.eq.s32.totalorder %s26, 0
      %p205 = por %p203, %p204
      %p206 = scmp.le.s32.totalorder 1, %s20
      %p207 = scmp.lt.s32.totalorder %s20, 3
      %p208 = pnand %p206, %p207
      %p209 = pneg %p208
      // Predicated region
      $region9: #{a_call__.1} parent=5 // pred_check
        _
      $region10: #{a_call__.1} parent=5 // pred_check_branch
        %211 = sbr.rel (%p208) target = $region12
      $region11: #{a_call__.1} parent=5 // pred_region
        %s212 = ssub.s32 %s20, 1
        // Predicated region
        $region13: #{a_call__.1} parent=11 // pred_check
          %p213 = pneg %p67
        $region14: #{a_call__.1} parent=11 // pred_check_branch
          %215 = sbr.rel (%p213) target = $region16
        $region15: #{a_call__.1} parent=11 // pred_region
          _
        $region16: #{a_call__.1} parent=11 // pred_fallthru
          _
        // Predicated region
        $region17: #{a_call__.1} parent=11 // pred_check
          %p216 = pneg %p88
        $region18: #{a_call__.1} parent=11 // pred_check_branch
          %218 = sbr.rel (%p216) target = $region20
        $region19: #{a_call__.1} parent=11 // pred_region
          _
        $region20: #{a_call__.1} parent=11 // pred_fallthru
          _
        // Predicated region
        $region21: #{a_call__.1} parent=11 // pred_check
          %p219 = pneg %p109
        $region22: #{a_call__.1} parent=11 // pred_check_branch
          %221 = sbr.rel (%p219) target = $region24
        $region23: #{a_call__.1} parent=11 // pred_region
          %s223 = ssub.s32 256, 256
          %224 = vsyncadd [#allocation6], %s223
          %s225 = sshll.u32 [#allocation5], 4
          %s226 = int_to_ptr.vmem [resolvable:$true] %s225
          %231 = dma.hbm_to_vmem [thread:$0]  %s3, 256, %s226, [#allocation6], 128, 128, 8
        $region24: #{a_call__.1} parent=11 // pred_fallthru
          _
        // Predicated region
        $region25: #{a_call__.1} parent=11 // pred_check
          %p232 = pneg %p130
        $region26: #{a_call__.1} parent=11 // pred_check_branch
          %234 = sbr.rel (%p232) target = $region28
        $region27: #{a_call__.1} parent=11 // pred_region
          _
        $region28: #{a_call__.1} parent=11 // pred_fallthru
          _
        // Predicated region
        $region29: #{a_call__.1} parent=11 // pred_check
          %p235 = pneg %p151
        $region30: #{a_call__.1} parent=11 // pred_check_branch
          %237 = sbr.rel (%p235) target = $region32
        $region31: #{a_call__.1} parent=11 // pred_region
          %s239 = ssub.s32 1024, 1024
          %240 = vsyncadd [#allocation6], %s239
          %s241 = sshll.u32 [#allocation7], 4
          %s242 = int_to_ptr.vmem [resolvable:$true] %s241
          %247 = dma.hbm_to_vmem [thread:$0]  %s5, 1024, %s242, [#allocation6], 64, 64, 4
        $region32: #{a_call__.1} parent=11 // pred_fallthru
          _
        // Predicated region
        $region33: #{a_call__.1} parent=11 // pred_check
          %p248 = pneg %p172
        $region34: #{a_call__.1} parent=11 // pred_check_branch
          %250 = sbr.rel (%p248) target = $region36
        $region35: #{a_call__.1} parent=11 // pred_region
          _
        $region36: #{a_call__.1} parent=11 // pred_fallthru
          _
      $region12: #{a_call__.1} parent=5 // pred_fallthru
        _
      %p251 = scmp.lt.s32.totalorder %s20, 2
      // Predicated region
      $region37: #{a_call__.1} parent=5 // pred_check
        %p252 = pneg %p251
      $region38: #{a_call__.1} parent=5 // pred_check_branch
        %254 = sbr.rel (%p252) target = $region40
      $region39: #{a_call__.1} parent=5 // pred_region
        // Predicated region
        $region41: #{a_call__.1} parent=39 // pred_check
          %p255 = pneg %p40
        $region42: #{a_call__.1} parent=39 // pred_check_branch
          %257 = sbr.rel (%p255) target = $region44
        $region43: #{a_call__.1} parent=39 // pred_region
          %s258 = sand.u32 %s30, 1
          %s259 = scalar_lea.sflag [#allocation3], %s258
          %s260 = sand.u32 %s30, 1
          %s261 = smul.addr %s260, 256
          %s262 = scalar_lea.vmem [#allocation2], %s261
          %s264 = ssub.s32 4096, 4096
          %265 = vsyncadd %s259, %s264
          %s266 = smul.addr %s20, 32
          %s267 = smul.addr %s266, 128
          %s268 = scalar_lea.hbm %s0, %s267
          %s269 = sshll.u32 %s262, 4
          %s270 = int_to_ptr.vmem [resolvable:$true] %s269
          %275 = dma.hbm_to_vmem [thread:$0]  %s268, 4096, %s270, %s259, 128, 128, 8
        $region44: #{a_call__.1} parent=39 // pred_fallthru
          _
      $region40: #{a_call__.1} parent=5 // pred_fallthru
        _
      %p276 = scmp.le.s32.totalorder 1, %s20
      %p277 = scmp.lt.s32.totalorder %s20, 3
      %p278 = pnand %p276, %p277
      %p279 = pneg %p278
      // Predicated region
      $region45: #{a_call__.1} parent=5 // pred_check
        _
      $region46: #{a_call__.1} parent=5 // pred_check_branch
        %281 = sbr.rel (%p278) target = $region48
      $region47: #{a_call__.1} parent=5 // pred_region
        %s282 = ssub.s32 %s20, 1
        %s283 = sand.u32 %s33, 1
        %s284 = scalar_lea.sflag [#allocation3], %s283
        %s285 = sand.u32 %s33, 1
        %s286 = smul.addr %s285, 256
        %s287 = scalar_lea.vmem [#allocation2], %s286
        // Predicated region
        $region49: #{a_call__.1} parent=47 // pred_check
          %p288 = pneg %p46
        $region50: #{a_call__.1} parent=47 // pred_check_branch
          %290 = sbr.rel (%p288) target = $region52
        $region51: #{a_call__.1} parent=47 // pred_region
          %291 = dma.done %s284, 4096
        $region52: #{a_call__.1} parent=47 // pred_fallthru
          _
        // Predicated region
        $region53: #{a_call__.1} parent=47 // pred_check
          %p292 = pneg %p109
        $region54: #{a_call__.1} parent=47 // pred_check_branch
          %294 = sbr.rel (%p292) target = $region56
        $region55: #{a_call__.1} parent=47 // pred_region
          %295 = dma.done [#allocation6], 256
        $region56: #{a_call__.1} parent=47 // pred_fallthru
          _
        // Predicated region
        $region57: #{a_call__.1} parent=47 // pred_check
          %p296 = pneg %p151
        $region58: #{a_call__.1} parent=47 // pred_check_branch
          %298 = sbr.rel (%p296) target = $region60
        $region59: #{a_call__.1} parent=47 // pred_region
          %299 = dma.done [#allocation6], 1024
        $region60: #{a_call__.1} parent=47 // pred_fallthru
          _
        %s300 = sand.u32 %s33, 1
        %s301 = scalar_lea.sflag [#allocation3], %s300
        %s302 = sand.u32 %s33, 1
        %s303 = smul.addr %s302, 256
        %s304 = scalar_lea.vmem [#allocation2], %s303
        %p305 = pneg %p46
        %p306 = pneg %p43
        %p307 = pneg %p67
        %p308 = pneg %p64
        %p309 = pneg %p88
        %p310 = pneg %p85
        %p311 = pneg %p109
        %p312 = pneg %p106
        %p313 = pneg %p130
        %p314 = pneg %p127
        %p315 = pneg %p151
        %p316 = pneg %p148
        %p317 = pneg %p172
        %p318 = pneg %p169
        %p319 = pneg %p198
        %p320 = pneg %p195
        %s321 = sand.u32 %s185, 1
        %s322 = scalar_lea.sflag [#allocation4], %s321
        %s323 = sand.u32 %s185, 1
        %s324 = smul.addr %s323, 256
        %s325 = scalar_lea.vmem [#allocation8], %s324
        %v327 = vld [vmem:[%s287] sm:$0xff]
        %v328 = vld [vmem:[%s287 + $0x8] sm:$0xff]
        %v329 = vld [vmem:[%s287 + $0x10] sm:$0xff]
        %v330 = vld [vmem:[%s287 + $0x18] sm:$0xff]
        %v331 = vld [vmem:[%s287 + $0x20] sm:$0xff]
        %v332 = vld [vmem:[%s287 + $0x28] sm:$0xff]
        %v333 = vld [vmem:[%s287 + $0x30] sm:$0xff]
        %v334 = vld [vmem:[%s287 + $0x38] sm:$0xff]
        %v335 = vld [vmem:[%s287 + $0x40] sm:$0xff]
        %v336 = vld [vmem:[%s287 + $0x48] sm:$0xff]
        %v337 = vld [vmem:[%s287 + $0x50] sm:$0xff]
        %v338 = vld [vmem:[%s287 + $0x58] sm:$0xff]
        %v339 = vld [vmem:[%s287 + $0x60] sm:$0xff]
        %v340 = vld [vmem:[%s287 + $0x68] sm:$0xff]
        %v341 = vld [vmem:[%s287 + $0x70] sm:$0xff]
        %v342 = vld [vmem:[%s287 + $0x78] sm:$0xff]
        %v343 = vld [vmem:[%s287 + $0x80] sm:$0xff]
        %v344 = vld [vmem:[%s287 + $0x88] sm:$0xff]
        %v345 = vld [vmem:[%s287 + $0x90] sm:$0xff]
        %v346 = vld [vmem:[%s287 + $0x98] sm:$0xff]
        %v347 = vld [vmem:[%s287 + $0xa0] sm:$0xff]
        %v348 = vld [vmem:[%s287 + $0xa8] sm:$0xff]
        %v349 = vld [vmem:[%s287 + $0xb0] sm:$0xff]
        %v350 = vld [vmem:[%s287 + $0xb8] sm:$0xff]
        %v351 = vld [vmem:[%s287 + $0xc0] sm:$0xff]
        %v352 = vld [vmem:[%s287 + $0xc8] sm:$0xff]
        %v353 = vld [vmem:[%s287 + $0xd0] sm:$0xff]
        %v354 = vld [vmem:[%s287 + $0xd8] sm:$0xff]
        %v355 = vld [vmem:[%s287 + $0xe0] sm:$0xff]
        %v356 = vld [vmem:[%s287 + $0xe8] sm:$0xff]
        %v357 = vld [vmem:[%s287 + $0xf0] sm:$0xff]
        %v358 = vld [vmem:[%s287 + $0xf8] sm:$0xff]
        %v359 = vpack.c.bf16 %v328, %v327
        %v360 = vpack.c.bf16 %v330, %v329
        %v361 = vpack.c.bf16 %v332, %v331
        %v362 = vpack.c.bf16 %v334, %v333
        %v363 = vpack.c.bf16 %v336, %v335
        %v364 = vpack.c.bf16 %v338, %v337
        %v365 = vpack.c.bf16 %v340, %v339
        %v366 = vpack.c.bf16 %v342, %v341
        %v367 = vpack.c.bf16 %v344, %v343
        %v368 = vpack.c.bf16 %v346, %v345
        %v369 = vpack.c.bf16 %v348, %v347
        %v370 = vpack.c.bf16 %v350, %v349
        %v371 = vpack.c.bf16 %v352, %v351
        %v372 = vpack.c.bf16 %v354, %v353
        %v373 = vpack.c.bf16 %v356, %v355
        %v374 = vpack.c.bf16 %v358, %v357
        %v375 = vld [vmem:[%s1] sm:$0xf]
        %v376 = vld [vmem:[%s1 + $0x4] sm:$0xf]
        %v377 = vld [vmem:[%s1 + $0x8] sm:$0xf]
        %v378 = vld [vmem:[%s1 + $0xc] sm:$0xf]
        %v379 = vld [vmem:[%s2] sm:$0x1]
        %v381 = vlaneseq
        %v382 = vshrl.u32 %v381, 7
        %v383 = vsub.s32 0, %v382
        %v384 = vrot.slane %v379, %v383
        %v390 = vunpack.c.l.b16 %v375
        %v391 = vunpack.c.l.b16 %v376
        %v392 = vunpack.c.l.b16 %v377
        %v393 = vunpack.c.l.b16 %v378
        %v394 = vpack.c.b16 %v391, %v390
        %v395 = vpack.c.b16 %v393, %v392
        %vm398 = vcmask 261120
        %v400 = vsel %vm398, %v359, 0
        %v403 = vsel %vm398, %v360, 0
        %v406 = vsel %vm398, %v361, 0
        %v409 = vsel %vm398, %v362, 0
        %v412 = vsel %vm398, %v363, 0
        %v415 = vsel %vm398, %v364, 0
        %v418 = vsel %vm398, %v365, 0
        %v421 = vsel %vm398, %v366, 0
        %v424 = vsel %vm398, %v367, 0
        %v427 = vsel %vm398, %v368, 0
        %v430 = vsel %vm398, %v369, 0
        %v433 = vsel %vm398, %v370, 0
        %v436 = vsel %vm398, %v371, 0
        %v439 = vsel %vm398, %v372, 0
        %v442 = vsel %vm398, %v373, 0
        %v445 = vsel %vm398, %v374, 0
        %447 = vmatprep.subr.bf16.mxu0 0
        %448 = vmatpush1.bf16.msra.mxu0 %v394
        %449 = vmatprep.subr.bf16.mxu0 0
        %450 = vmatpush1.bf16.msra.mxu0 %v395
        %451 = vmatprep.subr.bf16.mxu0 0
        %452 = vmatpush1.bf16.msra.mxu0 0
        %453 = vmatprep.subr.bf16.mxu0 0
        %454 = vmatpush1.bf16.msra.mxu0 0
        %455 = vmatprep.subr.bf16.mxu0 0
        %456 = vmatpush1.bf16.msra.mxu0 0
        %457 = vmatprep.subr.bf16.mxu0 0
        %458 = vmatpush1.bf16.msra.mxu0 0
        %459 = vmatprep.subr.bf16.mxu0 0
        %460 = vmatpush1.bf16.msra.mxu0 0
        %461 = vmatprep.subr.bf16.mxu0 0
        %462 = vmatpush1.bf16.msra.mxu0 0
        %463 = vmatprep.subr.bf16.mxu0 0
        %464 = vmatpush1.bf16.msra.mxu0 0
        %465 = vmatprep.subr.bf16.mxu0 0
        %466 = vmatpush1.bf16.msra.mxu0 0
        %467 = vmatprep.subr.bf16.mxu0 0
        %468 = vmatpush1.bf16.msra.mxu0 0
        %469 = vmatprep.subr.bf16.mxu0 0
        %470 = vmatpush1.bf16.msra.mxu0 0
        %471 = vmatprep.subr.bf16.mxu0 0
        %472 = vmatpush1.bf16.msra.mxu0 0
        %473 = vmatprep.subr.bf16.mxu0 0
        %474 = vmatpush1.bf16.msra.mxu0 0
        %475 = vmatprep.subr.bf16.mxu0 0
        %476 = vmatpush1.bf16.msra.mxu0 0
        %477 = vmatprep.subr.bf16.mxu0 0
        %478 = vmatpush1.bf16.msra.mxu0 0
        %479 = vmatprep.mubr.bf16.mxu0 0
        %480 = vmatmul.mubr.bf16.gmra.mrb[0].mxu0 %v400
        %v481 = vpop.f32.mrb[0].mxu0
        %v482 = vadd.f32 %v384, %v481
        %v483 = vpop.f32.mrb[0].mxu0
        %v484 = vpop.f32.mrb[0].mxu0
        %v485 = vadd.f32 %v384, %v484
        %v486 = vpop.f32.mrb[0].mxu0
        %487 = vmatprep.mubr.bf16.mxu0 0
        %488 = vmatmul.mubr.bf16.gmra.mrb[0].mxu0 %v403
        %v489 = vpop.f32.mrb[0].mxu0
        %v490 = vadd.f32 %v384, %v489
        %v491 = vpop.f32.mrb[0].mxu0
        %v492 = vpop.f32.mrb[0].mxu0
        %v493 = vadd.f32 %v384, %v492
        %v494 = vpop.f32.mrb[0].mxu0
        %495 = vmatprep.mubr.bf16.mxu0 0
        %496 = vmatmul.mubr.bf16.gmra.mrb[0].mxu0 %v406
        %v497 = vpop.f32.mrb[0].mxu0
        %v498 = vadd.f32 %v384, %v497
        %v499 = vpop.f32.mrb[0].mxu0
        %v500 = vpop.f32.mrb[0].mxu0
        %v501 = vadd.f32 %v384, %v500
        %v502 = vpop.f32.mrb[0].mxu0
        %503 = vmatprep.mubr.bf16.mxu0 0
        %504 = vmatmul.mubr.bf16.gmra.mrb[0].mxu0 %v409
        %v505 = vpop.f32.mrb[0].mxu0
        %v506 = vadd.f32 %v384, %v505
        %v507 = vpop.f32.mrb[0].mxu0
        %v508 = vpop.f32.mrb[0].mxu0
        %v509 = vadd.f32 %v384, %v508
        %v510 = vpop.f32.mrb[0].mxu0
        %511 = vmatprep.mubr.bf16.mxu0 0
        %512 = vmatmul.mubr.bf16.gmra.mrb[0].mxu0 %v412
        %v513 = vpop.f32.mrb[0].mxu0
        %v514 = vadd.f32 %v384, %v513
        %v515 = vpop.f32.mrb[0].mxu0
        %v516 = vpop.f32.mrb[0].mxu0
        %v517 = vadd.f32 %v384, %v516
        %v518 = vpop.f32.mrb[0].mxu0
        %519 = vmatprep.mubr.bf16.mxu0 0
        %520 = vmatmul.mubr.bf16.gmra.mrb[0].mxu0 %v415
        %v521 = vpop.f32.mrb[0].mxu0
        %v522 = vadd.f32 %v384, %v521
        %v523 = vpop.f32.mrb[0].mxu0
        %v524 = vpop.f32.mrb[0].mxu0
        %v525 = vadd.f32 %v384, %v524
        %v526 = vpop.f32.mrb[0].mxu0
        %527 = vmatprep.mubr.bf16.mxu0 0
        %528 = vmatmul.mubr.bf16.gmra.mrb[0].mxu0 %v418
        %v529 = vpop.f32.mrb[0].mxu0
        %v530 = vadd.f32 %v384, %v529
        %v531 = vpop.f32.mrb[0].mxu0
        %v532 = vpop.f32.mrb[0].mxu0
        %v533 = vadd.f32 %v384, %v532
        %v534 = vpop.f32.mrb[0].mxu0
        %535 = vmatprep.mubr.bf16.mxu0 0
        %536 = vmatmul.mubr.bf16.gmra.mrb[0].mxu0 %v421
        %v537 = vpop.f32.mrb[0].mxu0
        %v538 = vadd.f32 %v384, %v537
        %v539 = vpop.f32.mrb[0].mxu0
        %v540 = vpop.f32.mrb[0].mxu0
        %v541 = vadd.f32 %v384, %v540
        %v542 = vpop.f32.mrb[0].mxu0
        %543 = vmatprep.mubr.bf16.mxu0 0
        %544 = vmatmul.mubr.bf16.gmra.mrb[0].mxu0 %v424
        %v545 = vpop.f32.mrb[0].mxu0
        %v546 = vadd.f32 %v384, %v545
        %v547 = vpop.f32.mrb[0].mxu0
        %v548 = vpop.f32.mrb[0].mxu0
        %v549 = vadd.f32 %v384, %v548
        %v550 = vpop.f32.mrb[0].mxu0
        %551 = vmatprep.mubr.bf16.mxu0 0
        %552 = vmatmul.mubr.bf16.gmra.mrb[0].mxu0 %v427
        %v553 = vpop.f32.mrb[0].mxu0
        %v554 = vadd.f32 %v384, %v553
        %v555 = vpop.f32.mrb[0].mxu0
        %v556 = vpop.f32.mrb[0].mxu0
        %v557 = vadd.f32 %v384, %v556
        %v558 = vpop.f32.mrb[0].mxu0
        %559 = vmatprep.mubr.bf16.mxu0 0
        %560 = vmatmul.mubr.bf16.gmra.mrb[0].mxu0 %v430
        %v561 = vpop.f32.mrb[0].mxu0
        %v562 = vadd.f32 %v384, %v561
        %v563 = vpop.f32.mrb[0].mxu0
        %v564 = vpop.f32.mrb[0].mxu0
        %v565 = vadd.f32 %v384, %v564
        %v566 = vpop.f32.mrb[0].mxu0
        %567 = vmatprep.mubr.bf16.mxu0 0
        %568 = vmatmul.mubr.bf16.gmra.mrb[0].mxu0 %v433
        %v569 = vpop.f32.mrb[0].mxu0
        %v570 = vadd.f32 %v384, %v569
        %v571 = vpop.f32.mrb[0].mxu0
        %v572 = vpop.f32.mrb[0].mxu0
        %v573 = vadd.f32 %v384, %v572
        %v574 = vpop.f32.mrb[0].mxu0
        %575 = vmatprep.mubr.bf16.mxu0 0
        %576 = vmatmul.mubr.bf16.gmra.mrb[0].mxu0 %v436
        %v577 = vpop.f32.mrb[0].mxu0
        %v578 = vadd.f32 %v384, %v577
        %v579 = vpop.f32.mrb[0].mxu0
        %v580 = vpop.f32.mrb[0].mxu0
        %v581 = vadd.f32 %v384, %v580
        %v582 = vpop.f32.mrb[0].mxu0
        %583 = vmatprep.mubr.bf16.mxu0 0
        %584 = vmatmul.mubr.bf16.gmra.mrb[0].mxu0 %v439
        %v585 = vpop.f32.mrb[0].mxu0
        %v586 = vadd.f32 %v384, %v585
        %v587 = vpop.f32.mrb[0].mxu0
        %v588 = vpop.f32.mrb[0].mxu0
        %v589 = vadd.f32 %v384, %v588
        %v590 = vpop.f32.mrb[0].mxu0
        %591 = vmatprep.mubr.bf16.mxu0 0
        %592 = vmatmul.mubr.bf16.gmra.mrb[0].mxu0 %v442
        %v593 = vpop.f32.mrb[0].mxu0
        %v594 = vadd.f32 %v384, %v593
        %v595 = vpop.f32.mrb[0].mxu0
        %v596 = vpop.f32.mrb[0].mxu0
        %v597 = vadd.f32 %v384, %v596
        %v598 = vpop.f32.mrb[0].mxu0
        %599 = vmatprep.mubr.bf16.mxu0 0
        %600 = vmatmul.mubr.bf16.gmra.mrb[0].mxu0 %v445
        %v601 = vpop.f32.mrb[0].mxu0
        %v602 = vadd.f32 %v384, %v601
        %v603 = vpop.f32.mrb[0].mxu0
        %v604 = vpop.f32.mrb[0].mxu0
        %v605 = vadd.f32 %v384, %v604
        %v606 = vpop.f32.mrb[0].mxu0
        %607 = vdwg.mxu0
        %v608 = vmax.f32 %v482, 0.0
        %v609 = vmax.f32 %v485, 0.0
        %v610 = vmax.f32 %v490, 0.0
        %v611 = vmax.f32 %v493, 0.0
        %v612 = vmax.f32 %v498, 0.0
        %v613 = vmax.f32 %v501, 0.0
        %v614 = vmax.f32 %v506, 0.0
        %v615 = vmax.f32 %v509, 0.0
        %v616 = vmax.f32 %v514, 0.0
        %v617 = vmax.f32 %v517, 0.0
        %v618 = vmax.f32 %v522, 0.0
        %v619 = vmax.f32 %v525, 0.0
        %v620 = vmax.f32 %v530, 0.0
        %v621 = vmax.f32 %v533, 0.0
        %v622 = vmax.f32 %v538, 0.0
        %v623 = vmax.f32 %v541, 0.0
        %v624 = vmax.f32 %v546, 0.0
        %v625 = vmax.f32 %v549, 0.0
        %v626 = vmax.f32 %v554, 0.0
        %v627 = vmax.f32 %v557, 0.0
        %v628 = vmax.f32 %v562, 0.0
        %v629 = vmax.f32 %v565, 0.0
        %v630 = vmax.f32 %v570, 0.0
        %v631 = vmax.f32 %v573, 0.0
        %v632 = vmax.f32 %v578, 0.0
        %v633 = vmax.f32 %v581, 0.0
        %v634 = vmax.f32 %v586, 0.0
        %v635 = vmax.f32 %v589, 0.0
        %v636 = vmax.f32 %v594, 0.0
        %v637 = vmax.f32 %v597, 0.0
        %v638 = vmax.f32 %v602, 0.0
        %v639 = vmax.f32 %v605, 0.0
        %v640 = vmin.f32 %v608, 6.0
        %v641 = vmin.f32 %v609, 6.0
        %v642 = vmin.f32 %v610, 6.0
        %v643 = vmin.f32 %v611, 6.0
        %v644 = vmin.f32 %v612, 6.0
        %v645 = vmin.f32 %v613, 6.0
        %v646 = vmin.f32 %v614, 6.0
        %v647 = vmin.f32 %v615, 6.0
        %v648 = vmin.f32 %v616, 6.0
        %v649 = vmin.f32 %v617, 6.0
        %v650 = vmin.f32 %v618, 6.0
        %v651 = vmin.f32 %v619, 6.0
        %v652 = vmin.f32 %v620, 6.0
        %v653 = vmin.f32 %v621, 6.0
        %v654 = vmin.f32 %v622, 6.0
        %v655 = vmin.f32 %v623, 6.0
        %v656 = vmin.f32 %v624, 6.0
        %v657 = vmin.f32 %v625, 6.0
        %v658 = vmin.f32 %v626, 6.0
        %v659 = vmin.f32 %v627, 6.0
        %v660 = vmin.f32 %v628, 6.0
        %v661 = vmin.f32 %v629, 6.0
        %v662 = vmin.f32 %v630, 6.0
        %v663 = vmin.f32 %v631, 6.0
        %v664 = vmin.f32 %v632, 6.0
        %v665 = vmin.f32 %v633, 6.0
        %v666 = vmin.f32 %v634, 6.0
        %v667 = vmin.f32 %v635, 6.0
        %v668 = vmin.f32 %v636, 6.0
        %v669 = vmin.f32 %v637, 6.0
        %v670 = vmin.f32 %v638, 6.0
        %v671 = vmin.f32 %v639, 6.0
        %vm704 = vcmask 1040384
        %v705 = vrot.slane %v640, 7
        %v706 = vrot.slane %v641, 7
        %v707 = vsel %vm704, %v705, %v706
        %v708 = vrot.slane %v642, 7
        %v709 = vrot.slane %v643, 7
        %v710 = vsel %vm704, %v708, %v709
        %v711 = vrot.slane %v644, 7
        %v712 = vrot.slane %v645, 7
        %v713 = vsel %vm704, %v711, %v712
        %v714 = vrot.slane %v646, 7
        %v715 = vrot.slane %v647, 7
        %v716 = vsel %vm704, %v714, %v715
        %v717 = vrot.slane %v648, 7
        %v718 = vrot.slane %v649, 7
        %v719 = vsel %vm704, %v717, %v718
        %v720 = vrot.slane %v650, 7
        %v721 = vrot.slane %v651, 7
        %v722 = vsel %vm704, %v720, %v721
        %v723 = vrot.slane %v652, 7
        %v724 = vrot.slane %v653, 7
        %v725 = vsel %vm704, %v723, %v724
        %v726 = vrot.slane %v654, 7
        %v727 = vrot.slane %v655, 7
        %v728 = vsel %vm704, %v726, %v727
        %v729 = vrot.slane %v656, 7
        %v730 = vrot.slane %v657, 7
        %v731 = vsel %vm704, %v729, %v730
        %v732 = vrot.slane %v658, 7
        %v733 = vrot.slane %v659, 7
        %v734 = vsel %vm704, %v732, %v733
        %v735 = vrot.slane %v660, 7
        %v736 = vrot.slane %v661, 7
        %v737 = vsel %vm704, %v735, %v736
        %v738 = vrot.slane %v662, 7
        %v739 = vrot.slane %v663, 7
        %v740 = vsel %vm704, %v738, %v739
        %v741 = vrot.slane %v664, 7
        %v742 = vrot.slane %v665, 7
        %v743 = vsel %vm704, %v741, %v742
        %v744 = vrot.slane %v666, 7
        %v745 = vrot.slane %v667, 7
        %v746 = vsel %vm704, %v744, %v745
        %v747 = vrot.slane %v668, 7
        %v748 = vrot.slane %v669, 7
        %v749 = vsel %vm704, %v747, %v748
        %v750 = vrot.slane %v670, 7
        %v751 = vrot.slane %v671, 7
        %v752 = vsel %vm704, %v750, %v751
        %v785 = vsel %vm704, 0.0, %v705
        %v786 = vsel %vm704, 0.0, %v708
        %v787 = vsel %vm704, 0.0, %v711
        %v788 = vsel %vm704, 0.0, %v714
        %v789 = vsel %vm704, 0.0, %v717
        %v790 = vsel %vm704, 0.0, %v720
        %v791 = vsel %vm704, 0.0, %v723
        %v792 = vsel %vm704, 0.0, %v726
        %v793 = vsel %vm704, 0.0, %v729
        %v794 = vsel %vm704, 0.0, %v732
        %v795 = vsel %vm704, 0.0, %v735
        %v796 = vsel %vm704, 0.0, %v738
        %v797 = vsel %vm704, 0.0, %v741
        %v798 = vsel %vm704, 0.0, %v744
        %v799 = vsel %vm704, 0.0, %v747
        %v800 = vsel %vm704, 0.0, %v750
        %vm801 = vcmask 1046528
        %v802 = vrot.slane %v640, 1
        %v803 = vrot.slane %v641, 1
        %v804 = vsel %vm801, %v802, %v803
        %v805 = vrot.slane %v642, 1
        %v806 = vrot.slane %v643, 1
        %v807 = vsel %vm801, %v805, %v806
        %v808 = vrot.slane %v644, 1
        %v809 = vrot.slane %v645, 1
        %v810 = vsel %vm801, %v808, %v809
        %v811 = vrot.slane %v646, 1
        %v812 = vrot.slane %v647, 1
        %v813 = vsel %vm801, %v811, %v812
        %v814 = vrot.slane %v648, 1
        %v815 = vrot.slane %v649, 1
        %v816 = vsel %vm801, %v814, %v815
        %v817 = vrot.slane %v650, 1
        %v818 = vrot.slane %v651, 1
        %v819 = vsel %vm801, %v817, %v818
        %v820 = vrot.slane %v652, 1
        %v821 = vrot.slane %v653, 1
        %v822 = vsel %vm801, %v820, %v821
        %v823 = vrot.slane %v654, 1
        %v824 = vrot.slane %v655, 1
        %v825 = vsel %vm801, %v823, %v824
        %v826 = vrot.slane %v656, 1
        %v827 = vrot.slane %v657, 1
        %v828 = vsel %vm801, %v826, %v827
        %v829 = vrot.slane %v658, 1
        %v830 = vrot.slane %v659, 1
        %v831 = vsel %vm801, %v829, %v830
        %v832 = vrot.slane %v660, 1
        %v833 = vrot.slane %v661, 1
        %v834 = vsel %vm801, %v832, %v833
        %v835 = vrot.slane %v662, 1
        %v836 = vrot.slane %v663, 1
        %v837 = vsel %vm801, %v835, %v836
        %v838 = vrot.slane %v664, 1
        %v839 = vrot.slane %v665, 1
        %v840 = vsel %vm801, %v838, %v839
        %v841 = vrot.slane %v666, 1
        %v842 = vrot.slane %v667, 1
        %v843 = vsel %vm801, %v841, %v842
        %v844 = vrot.slane %v668, 1
        %v845 = vrot.slane %v669, 1
        %v846 = vsel %vm801, %v844, %v845
        %v847 = vrot.slane %v670, 1
        %v848 = vrot.slane %v671, 1
        %v849 = vsel %vm801, %v847, %v848
        %v882 = vsel %vm801, %v803, 0.0
        %v883 = vsel %vm801, %v806, 0.0
        %v884 = vsel %vm801, %v809, 0.0
        %v885 = vsel %vm801, %v812, 0.0
        %v886 = vsel %vm801, %v815, 0.0
        %v887 = vsel %vm801, %v818, 0.0
        %v888 = vsel %vm801, %v821, 0.0
        %v889 = vsel %vm801, %v824, 0.0
        %v890 = vsel %vm801, %v827, 0.0
        %v891 = vsel %vm801, %v830, 0.0
        %v892 = vsel %vm801, %v833, 0.0
        %v893 = vsel %vm801, %v836, 0.0
        %v894 = vsel %vm801, %v839, 0.0
        %v895 = vsel %vm801, %v842, 0.0
        %v896 = vsel %vm801, %v845, 0.0
        %v897 = vsel %vm801, %v848, 0.0
        %v898 = vld [vmem:[#allocation5] sm:$0xff]
        %v899 = vld [vmem:[#allocation5 + $0x8] sm:$0x1]
        %v900 = vlaneseq
        %v901 = vshrl.u32 %v900, 7
        %v902 = vsub.s32 0, %v901
        %v903 = vrot.slane %v898, %v902
        %v904 = vmul.f32 %v903, 0.0
        %v905 = vmul.f32 %v785, %v903
        %v906 = vmul.f32 %v707, %v903
        %v907 = vmul.f32 %v786, %v903
        %v908 = vmul.f32 %v710, %v903
        %v909 = vmul.f32 %v787, %v903
        %v910 = vmul.f32 %v713, %v903
        %v911 = vmul.f32 %v788, %v903
        %v912 = vmul.f32 %v716, %v903
        %v913 = vmul.f32 %v789, %v903
        %v914 = vmul.f32 %v719, %v903
        %v915 = vmul.f32 %v790, %v903
        %v916 = vmul.f32 %v722, %v903
        %v917 = vmul.f32 %v791, %v903
        %v918 = vmul.f32 %v725, %v903
        %v919 = vmul.f32 %v792, %v903
        %v920 = vmul.f32 %v728, %v903
        %v921 = vmul.f32 %v793, %v903
        %v922 = vmul.f32 %v731, %v903
        %v923 = vmul.f32 %v794, %v903
        %v924 = vmul.f32 %v734, %v903
        %v925 = vmul.f32 %v795, %v903
        %v926 = vmul.f32 %v737, %v903
        %v927 = vmul.f32 %v796, %v903
        %v928 = vmul.f32 %v740, %v903
        %v929 = vmul.f32 %v797, %v903
        %v930 = vmul.f32 %v743, %v903
        %v931 = vmul.f32 %v798, %v903
        %v932 = vmul.f32 %v746, %v903
        %v933 = vmul.f32 %v799, %v903
        %v934 = vmul.f32 %v749, %v903
        %v935 = vlaneseq
        %v936 = vshrl.u32 %v935, 7
        %v937 = vsub.s32 1, %v936
        %v938 = vrot.slane %v898, %v937
        %v939 = vmul.f32 %v938, 0.0
        %v940 = vmul.f32 %v640, %v938
        %v941 = vmul.f32 %v641, %v938
        %v942 = vmul.f32 %v642, %v938
        %v943 = vmul.f32 %v643, %v938
        %v944 = vmul.f32 %v644, %v938
        %v945 = vmul.f32 %v645, %v938
        %v946 = vmul.f32 %v646, %v938
        %v947 = vmul.f32 %v647, %v938
        %v948 = vmul.f32 %v648, %v938
        %v949 = vmul.f32 %v649, %v938
        %v950 = vmul.f32 %v650, %v938
        %v951 = vmul.f32 %v651, %v938
        %v952 = vmul.f32 %v652, %v938
        %v953 = vmul.f32 %v653, %v938
        %v954 = vmul.f32 %v654, %v938
        %v955 = vmul.f32 %v655, %v938
        %v956 = vmul.f32 %v656, %v938
        %v957 = vmul.f32 %v657, %v938
        %v958 = vmul.f32 %v658, %v938
        %v959 = vmul.f32 %v659, %v938
        %v960 = vmul.f32 %v660, %v938
        %v961 = vmul.f32 %v661, %v938
        %v962 = vmul.f32 %v662, %v938
        %v963 = vmul.f32 %v663, %v938
        %v964 = vmul.f32 %v664, %v938
        %v965 = vmul.f32 %v665, %v938
        %v966 = vmul.f32 %v666, %v938
        %v967 = vmul.f32 %v667, %v938
        %v968 = vmul.f32 %v668, %v938
        %v969 = vmul.f32 %v669, %v938
        %v970 = vadd.f32 %v904, %v939
        %v971 = vadd.f32 %v905, %v940
        %v972 = vadd.f32 %v906, %v941
        %v973 = vadd.f32 %v907, %v942
        %v974 = vadd.f32 %v908, %v943
        %v975 = vadd.f32 %v909, %v944
        %v976 = vadd.f32 %v910, %v945
        %v977 = vadd.f32 %v911, %v946
        %v978 = vadd.f32 %v912, %v947
        %v979 = vadd.f32 %v913, %v948
        %v980 = vadd.f32 %v914, %v949
        %v981 = vadd.f32 %v915, %v950
        %v982 = vadd.f32 %v916, %v951
        %v983 = vadd.f32 %v917, %v952
        %v984 = vadd.f32 %v918, %v953
        %v985 = vadd.f32 %v919, %v954
        %v986 = vadd.f32 %v920, %v955
        %v987 = vadd.f32 %v921, %v956
        %v988 = vadd.f32 %v922, %v957
        %v989 = vadd.f32 %v923, %v958
        %v990 = vadd.f32 %v924, %v959
        %v991 = vadd.f32 %v925, %v960
        %v992 = vadd.f32 %v926, %v961
        %v993 = vadd.f32 %v927, %v962
        %v994 = vadd.f32 %v928, %v963
        %v995 = vadd.f32 %v929, %v964
        %v996 = vadd.f32 %v930, %v965
        %v997 = vadd.f32 %v931, %v966
        %v998 = vadd.f32 %v932, %v967
        %v999 = vadd.f32 %v933, %v968
        %v1000 = vadd.f32 %v934, %v969
        %v1001 = vlaneseq
        %v1002 = vshrl.u32 %v1001, 7
        %v1003 = vsub.s32 2, %v1002
        %v1004 = vrot.slane %v898, %v1003
        %v1005 = vmul.f32 %v1004, 0.0
        %v1006 = vmul.f32 %v804, %v1004
        %v1007 = vmul.f32 %v882, %v1004
        %v1008 = vmul.f32 %v807, %v1004
        %v1009 = vmul.f32 %v883, %v1004
        %v1010 = vmul.f32 %v810, %v1004
        %v1011 = vmul.f32 %v884, %v1004
        %v1012 = vmul.f32 %v813, %v1004
        %v1013 = vmul.f32 %v885, %v1004
        %v1014 = vmul.f32 %v816, %v1004
        %v1015 = vmul.f32 %v886, %v1004
        %v1016 = vmul.f32 %v819, %v1004
        %v1017 = vmul.f32 %v887, %v1004
        %v1018 = vmul.f32 %v822, %v1004
        %v1019 = vmul.f32 %v888, %v1004
        %v1020 = vmul.f32 %v825, %v1004
        %v1021 = vmul.f32 %v889, %v1004
        %v1022 = vmul.f32 %v828, %v1004
        %v1023 = vmul.f32 %v890, %v1004
        %v1024 = vmul.f32 %v831, %v1004
        %v1025 = vmul.f32 %v891, %v1004
        %v1026 = vmul.f32 %v834, %v1004
        %v1027 = vmul.f32 %v892, %v1004
        %v1028 = vmul.f32 %v837, %v1004
        %v1029 = vmul.f32 %v893, %v1004
        %v1030 = vmul.f32 %v840, %v1004
        %v1031 = vmul.f32 %v894, %v1004
        %v1032 = vmul.f32 %v843, %v1004
        %v1033 = vmul.f32 %v895, %v1004
        %v1034 = vmul.f32 %v846, %v1004
        %v1035 = vmul.f32 %v896, %v1004
        %v1036 = vadd.f32 %v970, %v1005
        %v1037 = vadd.f32 %v971, %v1006
        %v1038 = vadd.f32 %v972, %v1007
        %v1039 = vadd.f32 %v973, %v1008
        %v1040 = vadd.f32 %v974, %v1009
        %v1041 = vadd.f32 %v975, %v1010
        %v1042 = vadd.f32 %v976, %v1011
        %v1043 = vadd.f32 %v977, %v1012
        %v1044 = vadd.f32 %v978, %v1013
        %v1045 = vadd.f32 %v979, %v1014
        %v1046 = vadd.f32 %v980, %v1015
        %v1047 = vadd.f32 %v981, %v1016
        %v1048 = vadd.f32 %v982, %v1017
        %v1049 = vadd.f32 %v983, %v1018
        %v1050 = vadd.f32 %v984, %v1019
        %v1051 = vadd.f32 %v985, %v1020
        %v1052 = vadd.f32 %v986, %v1021
        %v1053 = vadd.f32 %v987, %v1022
        %v1054 = vadd.f32 %v988, %v1023
        %v1055 = vadd.f32 %v989, %v1024
        %v1056 = vadd.f32 %v990, %v1025
        %v1057 = vadd.f32 %v991, %v1026
        %v1058 = vadd.f32 %v992, %v1027
        %v1059 = vadd.f32 %v993, %v1028
        %v1060 = vadd.f32 %v994, %v1029
        %v1061 = vadd.f32 %v995, %v1030
        %v1062 = vadd.f32 %v996, %v1031
        %v1063 = vadd.f32 %v997, %v1032
        %v1064 = vadd.f32 %v998, %v1033
        %v1065 = vadd.f32 %v999, %v1034
        %v1066 = vadd.f32 %v1000, %v1035
        %v1067 = vlaneseq
        %v1068 = vshrl.u32 %v1067, 7
        %v1069 = vsub.s32 3, %v1068
        %v1070 = vrot.slane %v898, %v1069
        %v1071 = vmul.f32 %v785, %v1070
        %v1072 = vmul.f32 %v707, %v1070
        %v1073 = vmul.f32 %v786, %v1070
        %v1074 = vmul.f32 %v710, %v1070
        %v1075 = vmul.f32 %v787, %v1070
        %v1076 = vmul.f32 %v713, %v1070
        %v1077 = vmul.f32 %v788, %v1070
        %v1078 = vmul.f32 %v716, %v1070
        %v1079 = vmul.f32 %v789, %v1070
        %v1080 = vmul.f32 %v719, %v1070
        %v1081 = vmul.f32 %v790, %v1070
        %v1082 = vmul.f32 %v722, %v1070
        %v1083 = vmul.f32 %v791, %v1070
        %v1084 = vmul.f32 %v725, %v1070
        %v1085 = vmul.f32 %v792, %v1070
        %v1086 = vmul.f32 %v728, %v1070
        %v1087 = vmul.f32 %v793, %v1070
        %v1088 = vmul.f32 %v731, %v1070
        %v1089 = vmul.f32 %v794, %v1070
        %v1090 = vmul.f32 %v734, %v1070
        %v1091 = vmul.f32 %v795, %v1070
        %v1092 = vmul.f32 %v737, %v1070
        %v1093 = vmul.f32 %v796, %v1070
        %v1094 = vmul.f32 %v740, %v1070
        %v1095 = vmul.f32 %v797, %v1070
        %v1096 = vmul.f32 %v743, %v1070
        %v1097 = vmul.f32 %v798, %v1070
        %v1098 = vmul.f32 %v746, %v1070
        %v1099 = vmul.f32 %v799, %v1070
        %v1100 = vmul.f32 %v749, %v1070
        %v1101 = vmul.f32 %v800, %v1070
        %v1102 = vmul.f32 %v752, %v1070
        %v1103 = vadd.f32 %v1036, %v1071
        %v1104 = vadd.f32 %v1036, %v1072
        %v1105 = vadd.f32 %v1037, %v1073
        %v1106 = vadd.f32 %v1038, %v1074
        %v1107 = vadd.f32 %v1039, %v1075
        %v1108 = vadd.f32 %v1040, %v1076
        %v1109 = vadd.f32 %v1041, %v1077
        %v1110 = vadd.f32 %v1042, %v1078
        %v1111 = vadd.f32 %v1043, %v1079
        %v1112 = vadd.f32 %v1044, %v1080
        %v1113 = vadd.f32 %v1045, %v1081
        %v1114 = vadd.f32 %v1046, %v1082
        %v1115 = vadd.f32 %v1047, %v1083
        %v1116 = vadd.f32 %v1048, %v1084
        %v1117 = vadd.f32 %v1049, %v1085
        %v1118 = vadd.f32 %v1050, %v1086
        %v1119 = vadd.f32 %v1051, %v1087
        %v1120 = vadd.f32 %v1052, %v1088
        %v1121 = vadd.f32 %v1053, %v1089
        %v1122 = vadd.f32 %v1054, %v1090
        %v1123 = vadd.f32 %v1055, %v1091
        %v1124 = vadd.f32 %v1056, %v1092
        %v1125 = vadd.f32 %v1057, %v1093
        %v1126 = vadd.f32 %v1058, %v1094
        %v1127 = vadd.f32 %v1059, %v1095
        %v1128 = vadd.f32 %v1060, %v1096
        %v1129 = vadd.f32 %v1061, %v1097
        %v1130 = vadd.f32 %v1062, %v1098
        %v1131 = vadd.f32 %v1063, %v1099
        %v1132 = vadd.f32 %v1064, %v1100
        %v1133 = vadd.f32 %v1065, %v1101
        %v1134 = vadd.f32 %v1066, %v1102
        %v1135 = vlaneseq
        %v1136 = vshrl.u32 %v1135, 7
        %v1137 = vsub.s32 4, %v1136
        %v1138 = vrot.slane %v898, %v1137
        %v1139 = vmul.f32 %v640, %v1138
        %v1140 = vmul.f32 %v641, %v1138
        %v1141 = vmul.f32 %v642, %v1138
        %v1142 = vmul.f32 %v643, %v1138
        %v1143 = vmul.f32 %v644, %v1138
        %v1144 = vmul.f32 %v645, %v1138
        %v1145 = vmul.f32 %v646, %v1138
        %v1146 = vmul.f32 %v647, %v1138
        %v1147 = vmul.f32 %v648, %v1138
        %v1148 = vmul.f32 %v649, %v1138
        %v1149 = vmul.f32 %v650, %v1138
        %v1150 = vmul.f32 %v651, %v1138
        %v1151 = vmul.f32 %v652, %v1138
        %v1152 = vmul.f32 %v653, %v1138
        %v1153 = vmul.f32 %v654, %v1138
        %v1154 = vmul.f32 %v655, %v1138
        %v1155 = vmul.f32 %v656, %v1138
        %v1156 = vmul.f32 %v657, %v1138
        %v1157 = vmul.f32 %v658, %v1138
        %v1158 = vmul.f32 %v659, %v1138
        %v1159 = vmul.f32 %v660, %v1138
        %v1160 = vmul.f32 %v661, %v1138
        %v1161 = vmul.f32 %v662, %v1138
        %v1162 = vmul.f32 %v663, %v1138
        %v1163 = vmul.f32 %v664, %v1138
        %v1164 = vmul.f32 %v665, %v1138
        %v1165 = vmul.f32 %v666, %v1138
        %v1166 = vmul.f32 %v667, %v1138
        %v1167 = vmul.f32 %v668, %v1138
        %v1168 = vmul.f32 %v669, %v1138
        %v1169 = vmul.f32 %v670, %v1138
        %v1170 = vmul.f32 %v671, %v1138
        %v1171 = vadd.f32 %v1103, %v1139
        %v1172 = vadd.f32 %v1104, %v1140
        %v1173 = vadd.f32 %v1105, %v1141
        %v1174 = vadd.f32 %v1106, %v1142
        %v1175 = vadd.f32 %v1107, %v1143
        %v1176 = vadd.f32 %v1108, %v1144
        %v1177 = vadd.f32 %v1109, %v1145
        %v1178 = vadd.f32 %v1110, %v1146
        %v1179 = vadd.f32 %v1111, %v1147
        %v1180 = vadd.f32 %v1112, %v1148
        %v1181 = vadd.f32 %v1113, %v1149
        %v1182 = vadd.f32 %v1114, %v1150
        %v1183 = vadd.f32 %v1115, %v1151
        %v1184 = vadd.f32 %v1116, %v1152
        %v1185 = vadd.f32 %v1117, %v1153
        %v1186 = vadd.f32 %v1118, %v1154
        %v1187 = vadd.f32 %v1119, %v1155
        %v1188 = vadd.f32 %v1120, %v1156
        %v1189 = vadd.f32 %v1121, %v1157
        %v1190 = vadd.f32 %v1122, %v1158
        %v1191 = vadd.f32 %v1123, %v1159
        %v1192 = vadd.f32 %v1124, %v1160
        %v1193 = vadd.f32 %v1125, %v1161
        %v1194 = vadd.f32 %v1126, %v1162
        %v1195 = vadd.f32 %v1127, %v1163
        %v1196 = vadd.f32 %v1128, %v1164
        %v1197 = vadd.f32 %v1129, %v1165
        %v1198 = vadd.f32 %v1130, %v1166
        %v1199 = vadd.f32 %v1131, %v1167
        %v1200 = vadd.f32 %v1132, %v1168
        %v1201 = vadd.f32 %v1133, %v1169
        %v1202 = vadd.f32 %v1134, %v1170
        %v1203 = vlaneseq
        %v1204 = vshrl.u32 %v1203, 7
        %v1205 = vsub.s32 5, %v1204
        %v1206 = vrot.slane %v898, %v1205
        %v1207 = vmul.f32 %v804, %v1206
        %v1208 = vmul.f32 %v882, %v1206
        %v1209 = vmul.f32 %v807, %v1206
        %v1210 = vmul.f32 %v883, %v1206
        %v1211 = vmul.f32 %v810, %v1206
        %v1212 = vmul.f32 %v884, %v1206
        %v1213 = vmul.f32 %v813, %v1206
        %v1214 = vmul.f32 %v885, %v1206
        %v1215 = vmul.f32 %v816, %v1206
        %v1216 = vmul.f32 %v886, %v1206
        %v1217 = vmul.f32 %v819, %v1206
        %v1218 = vmul.f32 %v887, %v1206
        %v1219 = vmul.f32 %v822, %v1206
        %v1220 = vmul.f32 %v888, %v1206
        %v1221 = vmul.f32 %v825, %v1206
        %v1222 = vmul.f32 %v889, %v1206
        %v1223 = vmul.f32 %v828, %v1206
        %v1224 = vmul.f32 %v890, %v1206
        %v1225 = vmul.f32 %v831, %v1206
        %v1226 = vmul.f32 %v891, %v1206
        %v1227 = vmul.f32 %v834, %v1206
        %v1228 = vmul.f32 %v892, %v1206
        %v1229 = vmul.f32 %v837, %v1206
        %v1230 = vmul.f32 %v893, %v1206
        %v1231 = vmul.f32 %v840, %v1206
        %v1232 = vmul.f32 %v894, %v1206
        %v1233 = vmul.f32 %v843, %v1206
        %v1234 = vmul.f32 %v895, %v1206
        %v1235 = vmul.f32 %v846, %v1206
        %v1236 = vmul.f32 %v896, %v1206
        %v1237 = vmul.f32 %v849, %v1206
        %v1238 = vmul.f32 %v897, %v1206
        %v1239 = vadd.f32 %v1171, %v1207
        %v1240 = vadd.f32 %v1172, %v1208
        %v1241 = vadd.f32 %v1173, %v1209
        %v1242 = vadd.f32 %v1174, %v1210
        %v1243 = vadd.f32 %v1175, %v1211
        %v1244 = vadd.f32 %v1176, %v1212
        %v1245 = vadd.f32 %v1177, %v1213
        %v1246 = vadd.f32 %v1178, %v1214
        %v1247 = vadd.f32 %v1179, %v1215
        %v1248 = vadd.f32 %v1180, %v1216
        %v1249 = vadd.f32 %v1181, %v1217
        %v1250 = vadd.f32 %v1182, %v1218
        %v1251 = vadd.f32 %v1183, %v1219
        %v1252 = vadd.f32 %v1184, %v1220
        %v1253 = vadd.f32 %v1185, %v1221
        %v1254 = vadd.f32 %v1186, %v1222
        %v1255 = vadd.f32 %v1187, %v1223
        %v1256 = vadd.f32 %v1188, %v1224
        %v1257 = vadd.f32 %v1189, %v1225
        %v1258 = vadd.f32 %v1190, %v1226
        %v1259 = vadd.f32 %v1191, %v1227
        %v1260 = vadd.f32 %v1192, %v1228
        %v1261 = vadd.f32 %v1193, %v1229
        %v1262 = vadd.f32 %v1194, %v1230
        %v1263 = vadd.f32 %v1195, %v1231
        %v1264 = vadd.f32 %v1196, %v1232
        %v1265 = vadd.f32 %v1197, %v1233
        %v1266 = vadd.f32 %v1198, %v1234
        %v1267 = vadd.f32 %v1199, %v1235
        %v1268 = vadd.f32 %v1200, %v1236
        %v1269 = vadd.f32 %v1201, %v1237
        %v1270 = vadd.f32 %v1202, %v1238
        %v1271 = vlaneseq
        %v1272 = vshrl.u32 %v1271, 7
        %v1273 = vsub.s32 6, %v1272
        %v1274 = vrot.slane %v898, %v1273
        %v1275 = vmul.f32 %v786, %v1274
        %v1276 = vmul.f32 %v710, %v1274
        %v1277 = vmul.f32 %v787, %v1274
        %v1278 = vmul.f32 %v713, %v1274
        %v1279 = vmul.f32 %v788, %v1274
        %v1280 = vmul.f32 %v716, %v1274
        %v1281 = vmul.f32 %v789, %v1274
        %v1282 = vmul.f32 %v719, %v1274
        %v1283 = vmul.f32 %v790, %v1274
        %v1284 = vmul.f32 %v722, %v1274
        %v1285 = vmul.f32 %v791, %v1274
        %v1286 = vmul.f32 %v725, %v1274
        %v1287 = vmul.f32 %v792, %v1274
        %v1288 = vmul.f32 %v728, %v1274
        %v1289 = vmul.f32 %v793, %v1274
        %v1290 = vmul.f32 %v731, %v1274
        %v1291 = vmul.f32 %v794, %v1274
        %v1292 = vmul.f32 %v734, %v1274
        %v1293 = vmul.f32 %v795, %v1274
        %v1294 = vmul.f32 %v737, %v1274
        %v1295 = vmul.f32 %v796, %v1274
        %v1296 = vmul.f32 %v740, %v1274
        %v1297 = vmul.f32 %v797, %v1274
        %v1298 = vmul.f32 %v743, %v1274
        %v1299 = vmul.f32 %v798, %v1274
        %v1300 = vmul.f32 %v746, %v1274
        %v1301 = vmul.f32 %v799, %v1274
        %v1302 = vmul.f32 %v749, %v1274
        %v1303 = vmul.f32 %v800, %v1274
        %v1304 = vmul.f32 %v752, %v1274
        %v1305 = vmul.f32 %v1274, 0.0
        %v1306 = vadd.f32 %v1239, %v1275
        %v1307 = vadd.f32 %v1240, %v1276
        %v1308 = vadd.f32 %v1241, %v1277
        %v1309 = vadd.f32 %v1242, %v1278
        %v1310 = vadd.f32 %v1243, %v1279
        %v1311 = vadd.f32 %v1244, %v1280
        %v1312 = vadd.f32 %v1245, %v1281
        %v1313 = vadd.f32 %v1246, %v1282
        %v1314 = vadd.f32 %v1247, %v1283
        %v1315 = vadd.f32 %v1248, %v1284
        %v1316 = vadd.f32 %v1249, %v1285
        %v1317 = vadd.f32 %v1250, %v1286
        %v1318 = vadd.f32 %v1251, %v1287
        %v1319 = vadd.f32 %v1252, %v1288
        %v1320 = vadd.f32 %v1253, %v1289
        %v1321 = vadd.f32 %v1254, %v1290
        %v1322 = vadd.f32 %v1255, %v1291
        %v1323 = vadd.f32 %v1256, %v1292
        %v1324 = vadd.f32 %v1257, %v1293
        %v1325 = vadd.f32 %v1258, %v1294
        %v1326 = vadd.f32 %v1259, %v1295
        %v1327 = vadd.f32 %v1260, %v1296
        %v1328 = vadd.f32 %v1261, %v1297
        %v1329 = vadd.f32 %v1262, %v1298
        %v1330 = vadd.f32 %v1263, %v1299
        %v1331 = vadd.f32 %v1264, %v1300
        %v1332 = vadd.f32 %v1265, %v1301
        %v1333 = vadd.f32 %v1266, %v1302
        %v1334 = vadd.f32 %v1267, %v1303
        %v1335 = vadd.f32 %v1268, %v1304
        %v1336 = vadd.f32 %v1269, %v1305
        %v1337 = vadd.f32 %v1270, %v1305
        %v1338 = vlaneseq
        %v1339 = vshrl.u32 %v1338, 7
        %v1340 = vsub.s32 7, %v1339
        %v1341 = vrot.slane %v898, %v1340
        %v1342 = vmul.f32 %v642, %v1341
        %v1343 = vmul.f32 %v643, %v1341
        %v1344 = vmul.f32 %v644, %v1341
        %v1345 = vmul.f32 %v645, %v1341
        %v1346 = vmul.f32 %v646, %v1341
        %v1347 = vmul.f32 %v647, %v1341
        %v1348 = vmul.f32 %v648, %v1341
        %v1349 = vmul.f32 %v649, %v1341
        %v1350 = vmul.f32 %v650, %v1341
        %v1351 = vmul.f32 %v651, %v1341
        %v1352 = vmul.f32 %v652, %v1341
        %v1353 = vmul.f32 %v653, %v1341
        %v1354 = vmul.f32 %v654, %v1341
        %v1355 = vmul.f32 %v655, %v1341
        %v1356 = vmul.f32 %v656, %v1341
        %v1357 = vmul.f32 %v657, %v1341
        %v1358 = vmul.f32 %v658, %v1341
        %v1359 = vmul.f32 %v659, %v1341
        %v1360 = vmul.f32 %v660, %v1341
        %v1361 = vmul.f32 %v661, %v1341
        %v1362 = vmul.f32 %v662, %v1341
        %v1363 = vmul.f32 %v663, %v1341
        %v1364 = vmul.f32 %v664, %v1341
        %v1365 = vmul.f32 %v665, %v1341
        %v1366 = vmul.f32 %v666, %v1341
        %v1367 = vmul.f32 %v667, %v1341
        %v1368 = vmul.f32 %v668, %v1341
        %v1369 = vmul.f32 %v669, %v1341
        %v1370 = vmul.f32 %v670, %v1341
        %v1371 = vmul.f32 %v671, %v1341
        %v1372 = vmul.f32 %v1341, 0.0
        %v1373 = vadd.f32 %v1306, %v1342
        %v1374 = vadd.f32 %v1307, %v1343
        %v1375 = vadd.f32 %v1308, %v1344
        %v1376 = vadd.f32 %v1309, %v1345
        %v1377 = vadd.f32 %v1310, %v1346
        %v1378 = vadd.f32 %v1311, %v1347
        %v1379 = vadd.f32 %v1312, %v1348
        %v1380 = vadd.f32 %v1313, %v1349
        %v1381 = vadd.f32 %v1314, %v1350
        %v1382 = vadd.f32 %v1315, %v1351
        %v1383 = vadd.f32 %v1316, %v1352
        %v1384 = vadd.f32 %v1317, %v1353
        %v1385 = vadd.f32 %v1318, %v1354
        %v1386 = vadd.f32 %v1319, %v1355
        %v1387 = vadd.f32 %v1320, %v1356
        %v1388 = vadd.f32 %v1321, %v1357
        %v1389 = vadd.f32 %v1322, %v1358
        %v1390 = vadd.f32 %v1323, %v1359
        %v1391 = vadd.f32 %v1324, %v1360
        %v1392 = vadd.f32 %v1325, %v1361
        %v1393 = vadd.f32 %v1326, %v1362
        %v1394 = vadd.f32 %v1327, %v1363
        %v1395 = vadd.f32 %v1328, %v1364
        %v1396 = vadd.f32 %v1329, %v1365
        %v1397 = vadd.f32 %v1330, %v1366
        %v1398 = vadd.f32 %v1331, %v1367
        %v1399 = vadd.f32 %v1332, %v1368
        %v1400 = vadd.f32 %v1333, %v1369
        %v1401 = vadd.f32 %v1334, %v1370
        %v1402 = vadd.f32 %v1335, %v1371
        %v1403 = vadd.f32 %v1336, %v1372
        %v1404 = vadd.f32 %v1337, %v1372
        %v1405 = vlaneseq
        %v1406 = vshrl.u32 %v1405, 7
        %v1407 = vsub.s32 0, %v1406
        %v1408 = vrot.slane %v899, %v1407
        %v1409 = vmul.f32 %v807, %v1408
        %v1410 = vmul.f32 %v883, %v1408
        %v1411 = vmul.f32 %v810, %v1408
        %v1412 = vmul.f32 %v884, %v1408
        %v1413 = vmul.f32 %v813, %v1408
        %v1414 = vmul.f32 %v885, %v1408
        %v1415 = vmul.f32 %v816, %v1408
        %v1416 = vmul.f32 %v886, %v1408
        %v1417 = vmul.f32 %v819, %v1408
        %v1418 = vmul.f32 %v887, %v1408
        %v1419 = vmul.f32 %v822, %v1408
        %v1420 = vmul.f32 %v888, %v1408
        %v1421 = vmul.f32 %v825, %v1408
        %v1422 = vmul.f32 %v889, %v1408
        %v1423 = vmul.f32 %v828, %v1408
        %v1424 = vmul.f32 %v890, %v1408
        %v1425 = vmul.f32 %v831, %v1408
        %v1426 = vmul.f32 %v891, %v1408
        %v1427 = vmul.f32 %v834, %v1408
        %v1428 = vmul.f32 %v892, %v1408
        %v1429 = vmul.f32 %v837, %v1408
        %v1430 = vmul.f32 %v893, %v1408
        %v1431 = vmul.f32 %v840, %v1408
        %v1432 = vmul.f32 %v894, %v1408
        %v1433 = vmul.f32 %v843, %v1408
        %v1434 = vmul.f32 %v895, %v1408
        %v1435 = vmul.f32 %v846, %v1408
        %v1436 = vmul.f32 %v896, %v1408
        %v1437 = vmul.f32 %v849, %v1408
        %v1438 = vmul.f32 %v897, %v1408
        %v1439 = vmul.f32 %v1408, 0.0
        %v1440 = vadd.f32 %v1373, %v1409
        %v1441 = vadd.f32 %v1374, %v1410
        %v1442 = vadd.f32 %v1375, %v1411
        %v1443 = vadd.f32 %v1376, %v1412
        %v1444 = vadd.f32 %v1377, %v1413
        %v1445 = vadd.f32 %v1378, %v1414
        %v1446 = vadd.f32 %v1379, %v1415
        %v1447 = vadd.f32 %v1380, %v1416
        %v1448 = vadd.f32 %v1381, %v1417
        %v1449 = vadd.f32 %v1382, %v1418
        %v1450 = vadd.f32 %v1383, %v1419
        %v1451 = vadd.f32 %v1384, %v1420
        %v1452 = vadd.f32 %v1385, %v1421
        %v1453 = vadd.f32 %v1386, %v1422
        %v1454 = vadd.f32 %v1387, %v1423
        %v1455 = vadd.f32 %v1388, %v1424
        %v1456 = vadd.f32 %v1389, %v1425
        %v1457 = vadd.f32 %v1390, %v1426
        %v1458 = vadd.f32 %v1391, %v1427
        %v1459 = vadd.f32 %v1392, %v1428
        %v1460 = vadd.f32 %v1393, %v1429
        %v1461 = vadd.f32 %v1394, %v1430
        %v1462 = vadd.f32 %v1395, %v1431
        %v1463 = vadd.f32 %v1396, %v1432
        %v1464 = vadd.f32 %v1397, %v1433
        %v1465 = vadd.f32 %v1398, %v1434
        %v1466 = vadd.f32 %v1399, %v1435
        %v1467 = vadd.f32 %v1400, %v1436
        %v1468 = vadd.f32 %v1401, %v1437
        %v1469 = vadd.f32 %v1402, %v1438
        %v1470 = vadd.f32 %v1403, %v1439
        %v1471 = vadd.f32 %v1404, %v1439
        %v1472 = vld [vmem:[%s4] sm:$0x1]
        %v1474 = vlaneseq
        %v1475 = vshrl.u32 %v1474, 7
        %v1476 = vsub.s32 0, %v1475
        %v1477 = vrot.slane %v1472, %v1476
        %v1479 = vadd.f32 %v1440, %v1477
        %v1480 = vadd.f32 %v1441, %v1477
        %v1481 = vadd.f32 %v1442, %v1477
        %v1482 = vadd.f32 %v1443, %v1477
        %v1483 = vadd.f32 %v1444, %v1477
        %v1484 = vadd.f32 %v1445, %v1477
        %v1485 = vadd.f32 %v1446, %v1477
        %v1486 = vadd.f32 %v1447, %v1477
        %v1487 = vadd.f32 %v1448, %v1477
        %v1488 = vadd.f32 %v1449, %v1477
        %v1489 = vadd.f32 %v1450, %v1477
        %v1490 = vadd.f32 %v1451, %v1477
        %v1491 = vadd.f32 %v1452, %v1477
        %v1492 = vadd.f32 %v1453, %v1477
        %v1493 = vadd.f32 %v1454, %v1477
        %v1494 = vadd.f32 %v1455, %v1477
        %v1495 = vadd.f32 %v1456, %v1477
        %v1496 = vadd.f32 %v1457, %v1477
        %v1497 = vadd.f32 %v1458, %v1477
        %v1498 = vadd.f32 %v1459, %v1477
        %v1499 = vadd.f32 %v1460, %v1477
        %v1500 = vadd.f32 %v1461, %v1477
        %v1501 = vadd.f32 %v1462, %v1477
        %v1502 = vadd.f32 %v1463, %v1477
        %v1503 = vadd.f32 %v1464, %v1477
        %v1504 = vadd.f32 %v1465, %v1477
        %v1505 = vadd.f32 %v1466, %v1477
        %v1506 = vadd.f32 %v1467, %v1477
        %v1507 = vadd.f32 %v1468, %v1477
        %v1508 = vadd.f32 %v1469, %v1477
        %v1509 = vadd.f32 %v1470, %v1477
        %v1510 = vadd.f32 %v1471, %v1477
        %v1511 = vmax.f32 %v1479, 0.0
        %v1512 = vmax.f32 %v1480, 0.0
        %v1513 = vmax.f32 %v1481, 0.0
        %v1514 = vmax.f32 %v1482, 0.0
        %v1515 = vmax.f32 %v1483, 0.0
        %v1516 = vmax.f32 %v1484, 0.0
        %v1517 = vmax.f32 %v1485, 0.0
        %v1518 = vmax.f32 %v1486, 0.0
        %v1519 = vmax.f32 %v1487, 0.0
        %v1520 = vmax.f32 %v1488, 0.0
        %v1521 = vmax.f32 %v1489, 0.0
        %v1522 = vmax.f32 %v1490, 0.0
        %v1523 = vmax.f32 %v1491, 0.0
        %v1524 = vmax.f32 %v1492, 0.0
        %v1525 = vmax.f32 %v1493, 0.0
        %v1526 = vmax.f32 %v1494, 0.0
        %v1527 = vmax.f32 %v1495, 0.0
        %v1528 = vmax.f32 %v1496, 0.0
        %v1529 = vmax.f32 %v1497, 0.0
        %v1530 = vmax.f32 %v1498, 0.0
        %v1531 = vmax.f32 %v1499, 0.0
        %v1532 = vmax.f32 %v1500, 0.0
        %v1533 = vmax.f32 %v1501, 0.0
        %v1534 = vmax.f32 %v1502, 0.0
        %v1535 = vmax.f32 %v1503, 0.0
        %v1536 = vmax.f32 %v1504, 0.0
        %v1537 = vmax.f32 %v1505, 0.0
        %v1538 = vmax.f32 %v1506, 0.0
        %v1539 = vmax.f32 %v1507, 0.0
        %v1540 = vmax.f32 %v1508, 0.0
        %v1541 = vmax.f32 %v1509, 0.0
        %v1542 = vmax.f32 %v1510, 0.0
        %v1543 = vmin.f32 %v1511, 6.0
        %v1544 = vmin.f32 %v1512, 6.0
        %v1545 = vmin.f32 %v1513, 6.0
        %v1546 = vmin.f32 %v1514, 6.0
        %v1547 = vmin.f32 %v1515, 6.0
        %v1548 = vmin.f32 %v1516, 6.0
        %v1549 = vmin.f32 %v1517, 6.0
        %v1550 = vmin.f32 %v1518, 6.0
        %v1551 = vmin.f32 %v1519, 6.0
        %v1552 = vmin.f32 %v1520, 6.0
        %v1553 = vmin.f32 %v1521, 6.0
        %v1554 = vmin.f32 %v1522, 6.0
        %v1555 = vmin.f32 %v1523, 6.0
        %v1556 = vmin.f32 %v1524, 6.0
        %v1557 = vmin.f32 %v1525, 6.0
        %v1558 = vmin.f32 %v1526, 6.0
        %v1559 = vmin.f32 %v1527, 6.0
        %v1560 = vmin.f32 %v1528, 6.0
        %v1561 = vmin.f32 %v1529, 6.0
        %v1562 = vmin.f32 %v1530, 6.0
        %v1563 = vmin.f32 %v1531, 6.0
        %v1564 = vmin.f32 %v1532, 6.0
        %v1565 = vmin.f32 %v1533, 6.0
        %v1566 = vmin.f32 %v1534, 6.0
        %v1567 = vmin.f32 %v1535, 6.0
        %v1568 = vmin.f32 %v1536, 6.0
        %v1569 = vmin.f32 %v1537, 6.0
        %v1570 = vmin.f32 %v1538, 6.0
        %v1571 = vmin.f32 %v1539, 6.0
        %v1572 = vmin.f32 %v1540, 6.0
        %v1573 = vmin.f32 %v1541, 6.0
        %v1574 = vmin.f32 %v1542, 6.0
        %v1575 = vpack.c.bf16 %v1544, %v1543
        %v1576 = vpack.c.bf16 %v1546, %v1545
        %v1577 = vpack.c.bf16 %v1548, %v1547
        %v1578 = vpack.c.bf16 %v1550, %v1549
        %v1579 = vpack.c.bf16 %v1552, %v1551
        %v1580 = vpack.c.bf16 %v1554, %v1553
        %v1581 = vpack.c.bf16 %v1556, %v1555
        %v1582 = vpack.c.bf16 %v1558, %v1557
        %v1583 = vpack.c.bf16 %v1560, %v1559
        %v1584 = vpack.c.bf16 %v1562, %v1561
        %v1585 = vpack.c.bf16 %v1564, %v1563
        %v1586 = vpack.c.bf16 %v1566, %v1565
        %v1587 = vpack.c.bf16 %v1568, %v1567
        %v1588 = vpack.c.bf16 %v1570, %v1569
        %v1589 = vpack.c.bf16 %v1572, %v1571
        %v1590 = vpack.c.bf16 %v1574, %v1573
        %v1591 = vld [vmem:[#allocation7] sm:$0xf]
        %v1592 = vld [vmem:[#allocation7 + $0x4] sm:$0xf]
        %v1593 = vld [vmem:[#allocation7 + $0x8] sm:$0xf]
        %v1594 = vld [vmem:[#allocation7 + $0xc] sm:$0xf]
        %v1595 = vld [vmem:[#allocation7 + $0x10] sm:$0xf]
        %v1596 = vld [vmem:[#allocation7 + $0x14] sm:$0xf]
        %v1597 = vld [vmem:[#allocation7 + $0x18] sm:$0xf]
        %v1598 = vld [vmem:[#allocation7 + $0x1c] sm:$0xf]
        %v1599 = vld [vmem:[#allocation7 + $0x20] sm:$0xf]
        %v1600 = vld [vmem:[#allocation7 + $0x24] sm:$0xf]
        %v1601 = vld [vmem:[#allocation7 + $0x28] sm:$0xf]
        %v1602 = vld [vmem:[#allocation7 + $0x2c] sm:$0xf]
        %v1603 = vld [vmem:[#allocation7 + $0x30] sm:$0xf]
        %v1604 = vld [vmem:[#allocation7 + $0x34] sm:$0xf]
        %v1605 = vld [vmem:[#allocation7 + $0x38] sm:$0xf]
        %v1606 = vld [vmem:[#allocation7 + $0x3c] sm:$0xf]
        %v1607 = vld [vmem:[%s6] sm:$0x1]
        %v1609 = vlaneseq
        %v1610 = vshrl.u32 %v1609, 7
        %v1611 = vsub.s32 0, %v1610
        %v1612 = vrot.slane %v1607, %v1611
        %v1630 = vunpack.c.l.b16 %v1591
        %v1631 = vunpack.c.l.b16 %v1592
        %v1632 = vunpack.c.l.b16 %v1593
        %v1633 = vunpack.c.l.b16 %v1594
        %v1634 = vunpack.c.l.b16 %v1595
        %v1635 = vunpack.c.l.b16 %v1596
        %v1636 = vunpack.c.l.b16 %v1597
        %v1637 = vunpack.c.l.b16 %v1598
        %v1638 = vunpack.c.l.b16 %v1599
        %v1639 = vunpack.c.l.b16 %v1600
        %v1640 = vunpack.c.l.b16 %v1601
        %v1641 = vunpack.c.l.b16 %v1602
        %v1642 = vunpack.c.l.b16 %v1603
        %v1643 = vunpack.c.l.b16 %v1604
        %v1644 = vunpack.c.l.b16 %v1605
        %v1645 = vunpack.c.l.b16 %v1606
        %v1646 = vpack.c.b16 %v1631, %v1630
        %v1647 = vpack.c.b16 %v1633, %v1632
        %v1648 = vpack.c.b16 %v1635, %v1634
        %v1649 = vpack.c.b16 %v1637, %v1636
        %v1650 = vpack.c.b16 %v1639, %v1638
        %v1651 = vpack.c.b16 %v1641, %v1640
        %v1652 = vpack.c.b16 %v1643, %v1642
        %v1653 = vpack.c.b16 %v1645, %v1644
        %1662 = vmatprep.subr.bf16.mxu0 0
        %1663 = vmatpush1.bf16.msra.mxu0 %v1646
        %1664 = vmatprep.subr.bf16.mxu0 0
        %1665 = vmatpush1.bf16.msra.mxu0 %v1647
        %1666 = vmatprep.subr.bf16.mxu0 0
        %1667 = vmatpush1.bf16.msra.mxu0 %v1648
        %1668 = vmatprep.subr.bf16.mxu0 0
        %1669 = vmatpush1.bf16.msra.mxu0 %v1649
        %1670 = vmatprep.subr.bf16.mxu0 0
        %1671 = vmatpush1.bf16.msra.mxu0 %v1650
        %1672 = vmatprep.subr.bf16.mxu0 0
        %1673 = vmatpush1.bf16.msra.mxu0 %v1651
        %1674 = vmatprep.subr.bf16.mxu0 0
        %1675 = vmatpush1.bf16.msra.mxu0 %v1652
        %1676 = vmatprep.subr.bf16.mxu0 0
        %1677 = vmatpush1.bf16.msra.mxu0 %v1653
        %1678 = vmatprep.subr.bf16.mxu0 0
        %1679 = vmatpush1.bf16.msra.mxu0 0
        %1680 = vmatprep.subr.bf16.mxu0 0
        %1681 = vmatpush1.bf16.msra.mxu0 0
        %1682 = vmatprep.subr.bf16.mxu0 0
        %1683 = vmatpush1.bf16.msra.mxu0 0
        %1684 = vmatprep.subr.bf16.mxu0 0
        %1685 = vmatpush1.bf16.msra.mxu0 0
        %1686 = vmatprep.subr.bf16.mxu0 0
        %1687 = vmatpush1.bf16.msra.mxu0 0
        %1688 = vmatprep.subr.bf16.mxu0 0
        %1689 = vmatpush1.bf16.msra.mxu0 0
        %1690 = vmatprep.subr.bf16.mxu0 0
        %1691 = vmatpush1.bf16.msra.mxu0 0
        %1692 = vmatprep.subr.bf16.mxu0 0
        %1693 = vmatpush1.bf16.msra.mxu0 0
        %1694 = vmatprep.mubr.bf16.mxu0 0
        %1695 = vmatmul.mubr.bf16.gmra.mrb[0].mxu0 %v1575
        %v1696 = vpop.f32.mrb[0].mxu0
        %v1697 = vadd.f32 %v1612, %v1696
        %v1698 = vpop.f32.mrb[0].mxu0
        %v1699 = vpop.f32.mrb[0].mxu0
        %v1700 = vadd.f32 %v1612, %v1699
        %v1701 = vpop.f32.mrb[0].mxu0
        %1702 = vmatprep.mubr.bf16.mxu0 0
        %1703 = vmatmul.mubr.bf16.gmra.mrb[0].mxu0 %v1576
        %v1704 = vpop.f32.mrb[0].mxu0
        %v1705 = vadd.f32 %v1612, %v1704
        %v1706 = vpop.f32.mrb[0].mxu0
        %v1707 = vpop.f32.mrb[0].mxu0
        %v1708 = vadd.f32 %v1612, %v1707
        %v1709 = vpop.f32.mrb[0].mxu0
        %1710 = vmatprep.mubr.bf16.mxu0 0
        %1711 = vmatmul.mubr.bf16.gmra.mrb[0].mxu0 %v1577
        %v1712 = vpop.f32.mrb[0].mxu0
        %v1713 = vadd.f32 %v1612, %v1712
        %v1714 = vpop.f32.mrb[0].mxu0
        %v1715 = vpop.f32.mrb[0].mxu0
        %v1716 = vadd.f32 %v1612, %v1715
        %v1717 = vpop.f32.mrb[0].mxu0
        %1718 = vmatprep.mubr.bf16.mxu0 0
        %1719 = vmatmul.mubr.bf16.gmra.mrb[0].mxu0 %v1578
        %v1720 = vpop.f32.mrb[0].mxu0
        %v1721 = vadd.f32 %v1612, %v1720
        %v1722 = vpop.f32.mrb[0].mxu0
        %v1723 = vpop.f32.mrb[0].mxu0
        %v1724 = vadd.f32 %v1612, %v1723
        %v1725 = vpop.f32.mrb[0].mxu0
        %1726 = vmatprep.mubr.bf16.mxu0 0
        %1727 = vmatmul.mubr.bf16.gmra.mrb[0].mxu0 %v1579
        %v1728 = vpop.f32.mrb[0].mxu0
        %v1729 = vadd.f32 %v1612, %v1728
        %v1730 = vpop.f32.mrb[0].mxu0
        %v1731 = vpop.f32.mrb[0].mxu0
        %v1732 = vadd.f32 %v1612, %v1731
        %v1733 = vpop.f32.mrb[0].mxu0
        %1734 = vmatprep.mubr.bf16.mxu0 0
        %1735 = vmatmul.mubr.bf16.gmra.mrb[0].mxu0 %v1580
        %v1736 = vpop.f32.mrb[0].mxu0
        %v1737 = vadd.f32 %v1612, %v1736
        %v1738 = vpop.f32.mrb[0].mxu0
        %v1739 = vpop.f32.mrb[0].mxu0
        %v1740 = vadd.f32 %v1612, %v1739
        %v1741 = vpop.f32.mrb[0].mxu0
        %1742 = vmatprep.mubr.bf16.mxu0 0
        %1743 = vmatmul.mubr.bf16.gmra.mrb[0].mxu0 %v1581
        %v1744 = vpop.f32.mrb[0].mxu0
        %v1745 = vadd.f32 %v1612, %v1744
        %v1746 = vpop.f32.mrb[0].mxu0
        %v1747 = vpop.f32.mrb[0].mxu0
        %v1748 = vadd.f32 %v1612, %v1747
        %v1749 = vpop.f32.mrb[0].mxu0
        %1750 = vmatprep.mubr.bf16.mxu0 0
        %1751 = vmatmul.mubr.bf16.gmra.mrb[0].mxu0 %v1582
        %v1752 = vpop.f32.mrb[0].mxu0
        %v1753 = vadd.f32 %v1612, %v1752
        %v1754 = vpop.f32.mrb[0].mxu0
        %v1755 = vpop.f32.mrb[0].mxu0
        %v1756 = vadd.f32 %v1612, %v1755
        %v1757 = vpop.f32.mrb[0].mxu0
        %1758 = vmatprep.mubr.bf16.mxu0 0
        %1759 = vmatmul.mubr.bf16.gmra.mrb[0].mxu0 %v1583
        %v1760 = vpop.f32.mrb[0].mxu0
        %v1761 = vadd.f32 %v1612, %v1760
        %v1762 = vpop.f32.mrb[0].mxu0
        %v1763 = vpop.f32.mrb[0].mxu0
        %v1764 = vadd.f32 %v1612, %v1763
        %v1765 = vpop.f32.mrb[0].mxu0
        %1766 = vmatprep.mubr.bf16.mxu0 0
        %1767 = vmatmul.mubr.bf16.gmra.mrb[0].mxu0 %v1584
        %v1768 = vpop.f32.mrb[0].mxu0
        %v1769 = vadd.f32 %v1612, %v1768
        %v1770 = vpop.f32.mrb[0].mxu0
        %v1771 = vpop.f32.mrb[0].mxu0
        %v1772 = vadd.f32 %v1612, %v1771
        %v1773 = vpop.f32.mrb[0].mxu0
        %1774 = vmatprep.mubr.bf16.mxu0 0
        %1775 = vmatmul.mubr.bf16.gmra.mrb[0].mxu0 %v1585
        %v1776 = vpop.f32.mrb[0].mxu0
        %v1777 = vadd.f32 %v1612, %v1776
        %v1778 = vpop.f32.mrb[0].mxu0
        %v1779 = vpop.f32.mrb[0].mxu0
        %v1780 = vadd.f32 %v1612, %v1779
        %v1781 = vpop.f32.mrb[0].mxu0
        %1782 = vmatprep.mubr.bf16.mxu0 0
        %1783 = vmatmul.mubr.bf16.gmra.mrb[0].mxu0 %v1586
        %v1784 = vpop.f32.mrb[0].mxu0
        %v1785 = vadd.f32 %v1612, %v1784
        %v1786 = vpop.f32.mrb[0].mxu0
        %v1787 = vpop.f32.mrb[0].mxu0
        %v1788 = vadd.f32 %v1612, %v1787
        %v1789 = vpop.f32.mrb[0].mxu0
        %1790 = vmatprep.mubr.bf16.mxu0 0
        %1791 = vmatmul.mubr.bf16.gmra.mrb[0].mxu0 %v1587
        %v1792 = vpop.f32.mrb[0].mxu0
        %v1793 = vadd.f32 %v1612, %v1792
        %v1794 = vpop.f32.mrb[0].mxu0
        %v1795 = vpop.f32.mrb[0].mxu0
        %v1796 = vadd.f32 %v1612, %v1795
        %v1797 = vpop.f32.mrb[0].mxu0
        %1798 = vmatprep.mubr.bf16.mxu0 0
        %1799 = vmatmul.mubr.bf16.gmra.mrb[0].mxu0 %v1588
        %v1800 = vpop.f32.mrb[0].mxu0
        %v1801 = vadd.f32 %v1612, %v1800
        %v1802 = vpop.f32.mrb[0].mxu0
        %v1803 = vpop.f32.mrb[0].mxu0
        %v1804 = vadd.f32 %v1612, %v1803
        %v1805 = vpop.f32.mrb[0].mxu0
        %1806 = vmatprep.mubr.bf16.mxu0 0
        %1807 = vmatmul.mubr.bf16.gmra.mrb[0].mxu0 %v1589
        %v1808 = vpop.f32.mrb[0].mxu0
        %v1809 = vadd.f32 %v1612, %v1808
        %v1810 = vpop.f32.mrb[0].mxu0
        %v1811 = vpop.f32.mrb[0].mxu0
        %v1812 = vadd.f32 %v1612, %v1811
        %v1813 = vpop.f32.mrb[0].mxu0
        %1814 = vmatprep.mubr.bf16.mxu0 0
        %1815 = vmatmul.mubr.bf16.gmra.mrb[0].mxu0 %v1590
        %v1816 = vpop.f32.mrb[0].mxu0
        %v1817 = vadd.f32 %v1612, %v1816
        %v1818 = vpop.f32.mrb[0].mxu0
        %v1819 = vpop.f32.mrb[0].mxu0
        %v1820 = vadd.f32 %v1612, %v1819
        %v1821 = vpop.f32.mrb[0].mxu0
        %1822 = vdwg.mxu0
        %v1823 = vadd.f32 %v1697, %v327
        %v1824 = vadd.f32 %v1700, %v328
        %v1825 = vadd.f32 %v1705, %v329
        %v1826 = vadd.f32 %v1708, %v330
        %v1827 = vadd.f32 %v1713, %v331
        %v1828 = vadd.f32 %v1716, %v332
        %v1829 = vadd.f32 %v1721, %v333
        %v1830 = vadd.f32 %v1724, %v334
        %v1831 = vadd.f32 %v1729, %v335
        %v1832 = vadd.f32 %v1732, %v336
        %v1833 = vadd.f32 %v1737, %v337
        %v1834 = vadd.f32 %v1740, %v338
        %v1835 = vadd.f32 %v1745, %v339
        %v1836 = vadd.f32 %v1748, %v340
        %v1837 = vadd.f32 %v1753, %v341
        %v1838 = vadd.f32 %v1756, %v342
        %v1839 = vadd.f32 %v1761, %v343
        %v1840 = vadd.f32 %v1764, %v344
        %v1841 = vadd.f32 %v1769, %v345
        %v1842 = vadd.f32 %v1772, %v346
        %v1843 = vadd.f32 %v1777, %v347
        %v1844 = vadd.f32 %v1780, %v348
        %v1845 = vadd.f32 %v1785, %v349
        %v1846 = vadd.f32 %v1788, %v350
        %v1847 = vadd.f32 %v1793, %v351
        %v1848 = vadd.f32 %v1796, %v352
        %v1849 = vadd.f32 %v1801, %v353
        %v1850 = vadd.f32 %v1804, %v354
        %v1851 = vadd.f32 %v1809, %v355
        %v1852 = vadd.f32 %v1812, %v356
        %v1853 = vadd.f32 %v1817, %v357
        %v1854 = vadd.f32 %v1820, %v358
        %1855 = vst.msk [vmem:[%s325] sm:$0xff] %vm398, %v1823
        %1856 = vst.msk [vmem:[%s325 + $0x8] sm:$0xff] %vm398, %v1824
        %1857 = vst.msk [vmem:[%s325 + $0x10] sm:$0xff] %vm398, %v1825
        %1858 = vst.msk [vmem:[%s325 + $0x18] sm:$0xff] %vm398, %v1826
        %1859 = vst.msk [vmem:[%s325 + $0x20] sm:$0xff] %vm398, %v1827
        %1860 = vst.msk [vmem:[%s325 + $0x28] sm:$0xff] %vm398, %v1828
        %1861 = vst.msk [vmem:[%s325 + $0x30] sm:$0xff] %vm398, %v1829
        %1862 = vst.msk [vmem:[%s325 + $0x38] sm:$0xff] %vm398, %v1830
        %1863 = vst.msk [vmem:[%s325 + $0x40] sm:$0xff] %vm398, %v1831
        %1864 = vst.msk [vmem:[%s325 + $0x48] sm:$0xff] %vm398, %v1832
        %1865 = vst.msk [vmem:[%s325 + $0x50] sm:$0xff] %vm398, %v1833
        %1866 = vst.msk [vmem:[%s325 + $0x58] sm:$0xff] %vm398, %v1834
        %1867 = vst.msk [vmem:[%s325 + $0x60] sm:$0xff] %vm398, %v1835
        %1868 = vst.msk [vmem:[%s325 + $0x68] sm:$0xff] %vm398, %v1836
        %1869 = vst.msk [vmem:[%s325 + $0x70] sm:$0xff] %vm398, %v1837
        %1870 = vst.msk [vmem:[%s325 + $0x78] sm:$0xff] %vm398, %v1838
        %1871 = vst.msk [vmem:[%s325 + $0x80] sm:$0xff] %vm398, %v1839
        %1872 = vst.msk [vmem:[%s325 + $0x88] sm:$0xff] %vm398, %v1840
        %1873 = vst.msk [vmem:[%s325 + $0x90] sm:$0xff] %vm398, %v1841
        %1874 = vst.msk [vmem:[%s325 + $0x98] sm:$0xff] %vm398, %v1842
        %1875 = vst.msk [vmem:[%s325 + $0xa0] sm:$0xff] %vm398, %v1843
        %1876 = vst.msk [vmem:[%s325 + $0xa8] sm:$0xff] %vm398, %v1844
        %1877 = vst.msk [vmem:[%s325 + $0xb0] sm:$0xff] %vm398, %v1845
        %1878 = vst.msk [vmem:[%s325 + $0xb8] sm:$0xff] %vm398, %v1846
        %1879 = vst.msk [vmem:[%s325 + $0xc0] sm:$0xff] %vm398, %v1847
        %1880 = vst.msk [vmem:[%s325 + $0xc8] sm:$0xff] %vm398, %v1848
        %1881 = vst.msk [vmem:[%s325 + $0xd0] sm:$0xff] %vm398, %v1849
        %1882 = vst.msk [vmem:[%s325 + $0xd8] sm:$0xff] %vm398, %v1850
        %1883 = vst.msk [vmem:[%s325 + $0xe0] sm:$0xff] %vm398, %v1851
        %1884 = vst.msk [vmem:[%s325 + $0xe8] sm:$0xff] %vm398, %v1852
        %1885 = vst.msk [vmem:[%s325 + $0xf0] sm:$0xff] %vm398, %v1853
        %1886 = vst.msk [vmem:[%s325 + $0xf8] sm:$0xff] %vm398, %v1854
        %s1887 = sand.u32 %s185, 1
        %s1888 = scalar_lea.sflag [#allocation4], %s1887
        %s1889 = sand.u32 %s185, 1
        %s1890 = smul.addr %s1889, 256
        %s1891 = scalar_lea.vmem [#allocation8], %s1890
        // Predicated region
        $region61: #{a_call__.1} parent=47 // pred_check
          %p1892 = pneg %p195
        $region62: #{a_call__.1} parent=47 // pred_check_branch
          %1894 = sbr.rel (%p1892) target = $region64
        $region63: #{a_call__.1} parent=47 // pred_region
          %s1896 = ssub.s32 4096, 4096
          %1897 = vsyncadd %s1888, %s1896
          %s1898 = smul.addr %s25, 32
          %s1899 = smul.addr %s1898, 128
          %s1900 = scalar_lea.hbm %s7, %s1899
          %s1901 = sshll.u32 %s1891, 4
          %s1902 = int_to_ptr.vmem [resolvable:$true] %s1901
          %1907 = dma.vmem_to_hbm [thread:$0]  %s1902, 4096, %s1900, %s1888, 128, 128, 8
        $region64: #{a_call__.1} parent=47 // pred_fallthru
          _
      $region48: #{a_call__.1} parent=5 // pred_fallthru
        _
      %p1908 = scmp.le.s32.totalorder 2, %s20
      // Predicated region
      $region65: #{a_call__.1} parent=5 // pred_check
        %p1909 = pneg %p1908
      $region66: #{a_call__.1} parent=5 // pred_check_branch
        %1911 = sbr.rel (%p1909) target = $region68
      $region67: #{a_call__.1} parent=5 // pred_region
        %s1912 = ssub.s32 %s20, 2
        // Predicated region
        $region69: #{a_call__.1} parent=67 // pred_check
          %p1913 = pneg %p201
        $region70: #{a_call__.1} parent=67 // pred_check_branch
          %1915 = sbr.rel (%p1913) target = $region72
        $region71: #{a_call__.1} parent=67 // pred_region
          %s1916 = sand.u32 %s186, 1
          %s1917 = scalar_lea.sflag [#allocation4], %s1916
          %s1918 = sand.u32 %s186, 1
          %s1919 = smul.addr %s1918, 256
          %s1920 = scalar_lea.vmem [#allocation8], %s1919
          %1921 = dma.done %s1917, 4096
        $region72: #{a_call__.1} parent=67 // pred_fallthru
          _
      $region68: #{a_call__.1} parent=5 // pred_fallthru
        _
    $region6: #{a_call__.1} parent=1 // loop_footer
      %s24 = sadd.s32 1, %s20
    $region7: #{a_call__.1} parent=1 // loop_footer_branch
      %19 = sbr.rel target = $region3
    $region8: #{a_call__.1} parent=1 // loop_exit
      _
    %1922 = vsyncpa [#allocation3], 1
    %s1923 = scalar_lea.sflag [#allocation3], 1
    %1924 = vsyncpa %s1923, 1
    %1925 = vsyncpa [#allocation6], 1
    %1926 = vsyncpa [#allocation4], 1
    %s1927 = scalar_lea.sflag [#allocation4], 1
    %1928 = vsyncpa %s1927, 1

</llo_original>
